<compile_context>
chip_gen: v7x
topology: tpu7x:2x2x1
jax: 0.10.0
libtpu: 0.0.40
codegen_flags: <defaults>
</compile_context>

<pallas_src>
import functools

import jax
import jax.numpy as jnp
from jax.experimental import pallas as pl
from jax.experimental.pallas import tpu as pltpu


# ----------------------------------------------------------------------------
# Pallas kernels: fused im2col matmul + BN-bias (+ residual) + ReLU epilogue.
# The BN scale is folded into the weights (f32) outside the kernel.
# ----------------------------------------------------------------------------
def _conv_bias_relu_kernel(g_ref, w_ref, bias_ref, o_ref):
    acc = jnp.dot(g_ref[...], w_ref[...], preferred_element_type=jnp.float32)
    o_ref[...] = jnp.maximum(acc + bias_ref[...], 0.0).astype(o_ref.dtype)


def _conv_bias_res_relu_kernel(g_ref, w_ref, bias_ref, res_ref, o_ref):
    acc = jnp.dot(g_ref[...], w_ref[...], preferred_element_type=jnp.float32)
    y = acc + bias_ref[...] + res_ref[...].astype(jnp.float32)
    o_ref[...] = jnp.maximum(y, 0.0).astype(o_ref.dtype)


def _round_up(x, m):
    return ((x + m - 1) // m) * m


def _vmem_budget_bytes():
    # <= 32 MiB everywhere (v7x has 64 MiB VMEM per TC, v5e/v6e 128 MiB),
    # never more than half of the reported capacity.
    cap = 64 << 20
    try:
        cap = int(getattr(pltpu.get_tpu_info(), "vmem_capacity_bytes", cap))
    except Exception:
        pass
    return int(min(32 << 20, max(16 << 20, cap // 2)))


def _pick_tile_n(n, kc_pad, c_pad, has_res, out_bytes):
    """Largest MXU-friendly N-tile (multiple of 16 for bf16 sublane packing)
    that fits the VMEM budget and leaves >= 4 grid steps (so both v7x cores
    still get a pipelined >=2-step loop); relaxes when N is small."""
    budget = _vmem_budget_bytes()

    def vmem_need(t):
        return (2 * t * kc_pad * 2            # double-buffered bf16 g tiles
                + 2 * kc_pad * c_pad * 2      # bf16 weight (x2: worst-case buffers)
                + 2 * 8 * c_pad * 4           # bias, sublane-padded
                + 2 * t * c_pad * out_bytes   # double-buffered output tiles
                + (2 * t * c_pad * 2 if has_res else 0))

    candidates = (512, 256, 128, 64, 32, 16)  # 256/512 keep the 256-wide MXU full
    for min_steps in (4, 2, 1):
        for t in candidates:
            if n >= min_steps * t and vmem_need(t) <= budget:
                return t
    return 16


def fused_im2col_conv_bn_relu(g_p, w2d, scale, bias, *, tile_n,
                              residual_p=None, out_dtype=jnp.float32):
    """g_p:        [n_pad, kc_pad] bf16 im2col matrix (already MXU-padded)
       w2d:        [kc, cout]      f32 conv weights (im2col layout)
       scale/bias: [1, cout]       f32 folded inference-mode BN params
       residual_p: [n_pad, c_pad]  bf16 or None
    Returns the PADDED output [n_pad, c_pad] in out_dtype (caller slices)."""
    n_pad, kc_pad = g_p.shape
    kc, cout = w2d.shape
    c_pad = _round_up(cout, 128)
    assert n_pad % tile_n == 0 and kc <= kc_pad

    # Fold the BN scale into the weights in f32 BEFORE the bf16 cast.
    w_folded = w2d.astype(jnp.float32) * scale.reshape(1, -1).astype(jnp.float32)
    w_p = jnp.pad(w_folded.astype(jnp.bfloat16),
                  ((0, kc_pad - kc), (0, c_pad - cout)))
    bias_p = jnp.pad(bias.reshape(1, -1).astype(jnp.float32),
                     ((0, 0), (0, c_pad - cout)))

    # TODO(synk): on v7x, pipeline_mode=pl.Buffered(1) on the constant-index
    #             weight/bias specs would halve their VMEM footprint (left at
    #             the default buffering for maximum compile compatibility).
    in_specs = [
        pl.BlockSpec((tile_n, kc_pad), lambda i: (i, 0)),
        pl.BlockSpec((kc_pad, c_pad), lambda i: (0, 0)),   # VMEM-resident weight
        pl.BlockSpec((1, c_pad), lambda i: (0, 0)),        # VMEM-resident bias
    ]
    args = [g_p, w_p, bias_p]
    out_bytes = jnp.dtype(out_dtype).itemsize
    bytes_accessed = (g_p.size * 2 + w_p.size * 2 + bias_p.size * 4
                      + n_pad * c_pad * out_bytes)

    if residual_p is not None:
        assert residual_p.shape == (n_pad, c_pad)
        in_specs.append(pl.BlockSpec((tile_n, c_pad), lambda i: (i, 0)))
        args.append(residual_p)
        bytes_accessed += residual_p.size * residual_p.dtype.itemsize
        kernel = _conv_bias_res_relu_kernel
    else:
        kernel = _conv_bias_relu_kernel

    out = pl.pallas_call(
        kernel,
        out_shape=jax.ShapeDtypeStruct((n_pad, c_pad), out_dtype),
        grid_spec=pltpu.PrefetchScalarGridSpec(
            num_scalar_prefetch=0,
            grid=(n_pad // tile_n,),
            in_specs=in_specs,
            out_specs=pl.BlockSpec((tile_n, c_pad), lambda i: (i, 0)),
        ),
        compiler_params=pltpu.CompilerParams(
            dimension_semantics=("parallel",),
            vmem_limit_bytes=_vmem_budget_bytes(),
        ),
        cost_estimate=pl.CostEstimate(
            flops=2 * n_pad * kc_pad * c_pad,
            transcendentals=0,
            bytes_accessed=int(bytes_accessed),
        ),
    )(*args)
    return out


# ----------------------------------------------------------------------------
# Glue: kernel (neighbor) map construction + im2col feature gather (plain JAX)
# ----------------------------------------------------------------------------
def build_kernel_map(coords, span):
    """coords: [N, 3] unique int32 with 0 <= coord < span - 1; span: STATIC
    python int.  Returns [27, N] int32 neighbor indices, -1 where
    coords[i] + offset_k does not exist (stride=1, dilation=1)."""
    r = jnp.arange(-1, 2)
    offs = jnp.stack(jnp.meshgrid(r, r, r, indexing="ij"), axis=-1).reshape(-1, 3)

    def key(c):
        return ((c[..., 0] + 1) * span + (c[..., 1] + 1)) * span + (c[..., 2] + 1)

    keys = key(coords)                                   # [N]
    q = coords[None, :, :] + offs[:, None, :]            # [27, N, 3]
    qkeys = key(q)                                       # [27, N]
    eq = qkeys[:, :, None] == keys[None, None, :]        # [27, N, N]
    exists = eq.any(axis=-1)
    idx = jnp.argmax(eq, axis=-1)
    # TODO(synk): O(27*N^2) dense neighbor search (and no negative-coord check);
    #             use a hash/sorted-key kernel map for realistic point counts.
    return jnp.where(exists, idx, -1).astype(jnp.int32)


def gather_im2col_bf16(feat, nbr_idx, n_pad, kc_pad):
    """feat: [M, C] (M >= number of valid points), nbr_idx: [K, N] (-1 missing).
    Returns the [n_pad, kc_pad] bf16 im2col matrix directly (gather happens in
    bf16, missing neighbors and all pad rows / pad columns are zero)."""
    m, c = feat.shape
    k, n = nbr_idx.shape
    feat_z = jnp.concatenate(
        [feat.astype(jnp.bfloat16), jnp.zeros((1, c), jnp.bfloat16)], axis=0)
    safe = jnp.where(nbr_idx < 0, m, nbr_idx)                       # [K, N]
    safe = jnp.pad(safe, ((0, 0), (0, n_pad - n)), constant_values=m)
    g = feat_z[safe]                                                # [K, n_pad, C]
    g = jnp.transpose(g, (1, 0, 2)).reshape(n_pad, k * c)
    return jnp.pad(g, ((0, 0), (0, kc_pad - k * c)))
    # TODO(synk): fuse this gather into the Pallas kernel (scalar-prefetched
    #             neighbor indices + per-tile DMA gather from HBM feat) to
    #             avoid materializing the [N, 27*C] im2col tensor in HBM.


# ----------------------------------------------------------------------------
# BasicBlock forward (stride=1, dilation=1, downsample=None)
# ----------------------------------------------------------------------------
def basic_block_forward(feat, coords, params, *, span):
    k3, cin, planes = params["w1"].shape
    n = feat.shape[0]
    assert feat.shape[1] == cin
    assert cin == planes                 # downsample=None => inplanes == planes
    cout = planes

    kc = k3 * cin
    kc_pad = _round_up(kc, 128)          # MXU-aligned contraction depth
    c_pad = _round_up(cout, 128)         # lane-dense output
    tile_n = _pick_tile_n(n, kc_pad, c_pad, True, 4)
    n_pad = _round_up(n, tile_n)

    nbr = build_kernel_map(coords, span)

    # conv1 -> norm1 -> relu. Output stays bf16 and row-padded to n_pad: pad
    # rows are never gathered by conv2, and only the final result is sliced.
    g1 = gather_im2col_bf16(feat, nbr, n_pad, kc_pad)
    h = fused_im2col_conv_bn_relu(
        g1, params["w1"].reshape(kc, planes), params["scale1"], params["bias1"],
        tile_n=tile_n, out_dtype=jnp.bfloat16)
    if c_pad != cout:
        h = h[:, :cout]   # drop zero pad columns (no-op when cout is 128-aligned)

    # conv2 -> norm2 -> + residual -> relu (residual streamed as bf16).
    res_p = jnp.pad(feat.astype(jnp.bfloat16),
                    ((0, n_pad - n), (0, c_pad - cout)))
    g2 = gather_im2col_bf16(h, nbr, n_pad, kc_pad)
    out_p = fused_im2col_conv_bn_relu(
        g2, params["w2"].reshape(kc, planes), params["scale2"], params["bias2"],
        tile_n=tile_n, residual_p=res_p, out_dtype=jnp.float32)
    return out_p[:n, :cout]              # single slice at the very end


# Pure-JAX reference mirroring the kernel's dtype path (bf16 operands with the
# BN scale folded in f32, f32 accumulation, bf16 conv1 output and residual).
def basic_block_reference(feat, coords, params, *, span):
    nbr = build_kernel_map(coords, span)
    n = feat.shape[0]

    def conv(f, w3d, scale, bias):
        kc = w3d.shape[0] * w3d.shape[1]
        w = (w3d.reshape(kc, -1).astype(jnp.float32)
             * scale.reshape(1, -1).astype(jnp.float32)).astype(jnp.bfloat16)
        g = gather_im2col_bf16(f, nbr, n, kc)
        return (jnp.dot(g, w, preferred_element_type=jnp.float32)
                + bias.reshape(1, -1))

    h = jnp.maximum(conv(feat, params["w1"], params["scale1"],
                         params["bias1"]), 0.0).astype(jnp.bfloat16)
    y = (conv(h, params["w2"], params["scale2"], params["bias2"])
         + feat.astype(jnp.bfloat16).astype(jnp.float32))
    return jnp.maximum(y, 0.0)


# ----------------------------------------------------------------------------
def make_params(key, inplanes, planes, eps=1e-5):
    """Deterministic conv weights + inference-mode BN folded to scale/bias."""
    ks = jax.random.split(key, 10)
    k3 = 27  # 3**dimension, dimension=3

    def bn_fold(kg, kb, km, kv, c):
        gamma = 1.0 + 0.1 * jax.random.normal(kg, (c,))
        beta = 0.1 * jax.random.normal(kb, (c,))
        mean = 0.1 * jax.random.normal(km, (c,))
        var = 0.5 + jax.random.uniform(kv, (c,))
        scale = gamma / jnp.sqrt(var + eps)
        bias = beta - mean * scale
        return scale.reshape(1, c), bias.reshape(1, c)

    w1 = 0.1 * jax.random.normal(ks[0], (k3, inplanes, planes), jnp.float32)
    w2 = 0.1 * jax.random.normal(ks[1], (k3, planes, planes), jnp.float32)
    scale1, bias1 = bn_fold(ks[2], ks[3], ks[4], ks[5], planes)
    scale2, bias2 = bn_fold(ks[6], ks[7], ks[8], ks[9], planes)
    return dict(w1=w1, w2=w2, scale1=scale1, bias1=bias1,
                scale2=scale2, bias2=bias2)


if __name__ == "__main__":
    key = jax.random.PRNGKey(0)
    k_feat, k_params = jax.random.split(key)

    dimension = 3
    inplanes = planes = 32        # downsample=None => inplanes == planes
    N = 128                       # number of sparse points
    GRID = 8                      # voxel grid side (coords in [0, GRID))
    SPAN = GRID + 2               # static span with room for +/-1 offsets

    # Deterministic unique voxel coordinates: first N points of an 8^3 grid.
    g = jnp.arange(GRID)
    grid = jnp.stack(jnp.meshgrid(g, g, g, indexing="ij"), axis=-1).reshape(-1, 3)
    coords = grid[:N].astype(jnp.int32)                   # [N, 3]

    feat = jax.random.normal(k_feat, (N, inplanes), jnp.float32)  # [N, Cin]
    params = make_params(k_params, inplanes, planes)

    fwd = jax.jit(functools.partial(basic_block_forward, span=SPAN))
    out = jax.block_until_ready(fwd(feat, coords, params))

    ref = basic_block_reference(feat, coords, params, span=SPAN)
    assert out.shape == (N, planes)
    assert jnp.allclose(out, ref, atol=2e-2, rtol=2e-2), float(
        jnp.max(jnp.abs(out - ref)))

    print("KERNEL_OK")
</pallas_src>

<mosaic_0001>
module attributes {stable_mosaic.version = 11 : i64} {
  func.func @_conv_bias_relu_kernel(%arg0: i32, %arg1: memref<32x896xbf16, #tpu.memory_space<vmem>>, %arg2: memref<896x128xbf16, #tpu.memory_space<vmem>>, %arg3: memref<1x128xf32, #tpu.memory_space<vmem>>, %arg4: memref<32x128xbf16, #tpu.memory_space<vmem>>) attributes {dimension_semantics = [#tpu.dimension_semantics<parallel>], iteration_bounds = array<i64: 4>, scalar_prefetch = 0 : i64, scratch_operands = 0 : i64, tpu.core_type = #tpu.core_type<tc>, window_params = [{transform_indices = @transform_0, window_bounds = array<i64: 32, 896>}, {pipeline_mode = #tpu.pipeline_mode<synchronous>, transform_indices = @transform_1, window_bounds = array<i64: 896, 128>}, {pipeline_mode = #tpu.pipeline_mode<synchronous>, transform_indices = @transform_2, window_bounds = array<i64: 1, 128>}, {transform_indices = @transform_3, window_bounds = array<i64: 32, 128>}]} {
    %c0 = arith.constant 0 : index
    %c0_0 = arith.constant 0 : index
    %0 = vector.load %arg1[%c0, %c0_0] : memref<32x896xbf16, #tpu.memory_space<vmem>>, vector<32x896xbf16>
    %c0_1 = arith.constant 0 : index
    %c0_2 = arith.constant 0 : index
    %1 = vector.load %arg2[%c0_1, %c0_2] : memref<896x128xbf16, #tpu.memory_space<vmem>>, vector<896x128xbf16>
    %cst = arith.constant dense<0.000000e+00> : vector<32x128xf32>
    %2 = tpu.matmul %0, %1, %cst {dimension_numbers = #tpu.dot_dimension_numbers<[1], [0], [0], [1], [0, 0, 1, 1], [], []>} : vector<32x896xbf16>, vector<896x128xbf16>, vector<32x128xf32> -> vector<32x128xf32>
    %c0_3 = arith.constant 0 : index
    %c0_4 = arith.constant 0 : index
    %3 = vector.load %arg3[%c0_3, %c0_4] : memref<1x128xf32, #tpu.memory_space<vmem>>, vector<1x128xf32>
    %4 = vector.broadcast %3 : vector<1x128xf32> to vector<32x128xf32>
    %5 = arith.addf %2, %4 : vector<32x128xf32>
    %cst_5 = arith.constant 0.000000e+00 : f32
    %6 = vector.broadcast %cst_5 : f32 to vector<32x128xf32>
    %7 = arith.maximumf %5, %6 : vector<32x128xf32>
    %8 = arith.truncf %7 : vector<32x128xf32> to vector<32x128xbf16>
    %c0_6 = arith.constant 0 : index
    %c0_7 = arith.constant 0 : index
    %9 = vector.load %arg4[%c0_6, %c0_7] : memref<32x128xbf16, #tpu.memory_space<vmem>>, vector<32x128xbf16>
    tpu.vector_store %arg4[%c0_6, %c0_7], %8 {strides = array<i32>} : memref<32x128xbf16, #tpu.memory_space<vmem>>, vector<32x128xbf16>,
    return
  }
  func.func @transform_0(%arg0: i32) -> (i32, i32) {
    %c0_i32 = arith.constant 0 : i32
    %c0_i32_0 = arith.constant 0 : i32
    return %arg0, %c0_i32 : i32, i32
  }
  func.func @transform_1(%arg0: i32) -> (i32, i32) {
    %c0_i32 = arith.constant 0 : i32
    %c0_i32_0 = arith.constant 0 : i32
    %c0_i32_1 = arith.constant 0 : i32
    return %c0_i32, %c0_i32_0 : i32, i32
  }
  func.func @transform_2(%arg0: i32) -> (i32, i32) {
    %c0_i32 = arith.constant 0 : i32
    %c0_i32_0 = arith.constant 0 : i32
    %c0_i32_1 = arith.constant 0 : i32
    return %c0_i32, %c0_i32_0 : i32, i32
  }
  func.func @transform_3(%arg0: i32) -> (i32, i32) {
    %c0_i32 = arith.constant 0 : i32
    %c0_i32_0 = arith.constant 0 : i32
    return %arg0, %c0_i32 : i32, i32
  }
}

module attributes {stable_mosaic.version = 11 : i64} {
  func.func @_conv_bias_res_relu_kernel(%arg0: i32, %arg1: memref<32x896xbf16, #tpu.memory_space<vmem>>, %arg2: memref<896x128xbf16, #tpu.memory_space<vmem>>, %arg3: memref<1x128xf32, #tpu.memory_space<vmem>>, %arg4: memref<32x128xbf16, #tpu.memory_space<vmem>>, %arg5: memref<32x128xf32, #tpu.memory_space<vmem>>) attributes {dimension_semantics = [#tpu.dimension_semantics<parallel>], iteration_bounds = array<i64: 4>, scalar_prefetch = 0 : i64, scratch_operands = 0 : i64, tpu.core_type = #tpu.core_type<tc>, window_params = [{transform_indices = @transform_0, window_bounds = array<i64: 32, 896>}, {pipeline_mode = #tpu.pipeline_mode<synchronous>, transform_indices = @transform_1, window_bounds = array<i64: 896, 128>}, {pipeline_mode = #tpu.pipeline_mode<synchronous>, transform_indices = @transform_2, window_bounds = array<i64: 1, 128>}, {transform_indices = @transform_3, window_bounds = array<i64: 32, 128>}, {transform_indices = @transform_4, window_bounds = array<i64: 32, 128>}]} {
    %c0 = arith.constant 0 : index
    %c0_0 = arith.constant 0 : index
    %0 = vector.load %arg1[%c0, %c0_0] : memref<32x896xbf16, #tpu.memory_space<vmem>>, vector<32x896xbf16>
    %c0_1 = arith.constant 0 : index
    %c0_2 = arith.constant 0 : index
    %1 = vector.load %arg2[%c0_1, %c0_2] : memref<896x128xbf16, #tpu.memory_space<vmem>>, vector<896x128xbf16>
    %cst = arith.constant dense<0.000000e+00> : vector<32x128xf32>
    %2 = tpu.matmul %0, %1, %cst {dimension_numbers = #tpu.dot_dimension_numbers<[1], [0], [0], [1], [0, 0, 1, 1], [], []>} : vector<32x896xbf16>, vector<896x128xbf16>, vector<32x128xf32> -> vector<32x128xf32>
    %c0_3 = arith.constant 0 : index
    %c0_4 = arith.constant 0 : index
    %3 = vector.load %arg3[%c0_3, %c0_4] : memref<1x128xf32, #tpu.memory_space<vmem>>, vector<1x128xf32>
    %4 = vector.broadcast %3 : vector<1x128xf32> to vector<32x128xf32>
    %5 = arith.addf %2, %4 : vector<32x128xf32>
    %c0_5 = arith.constant 0 : index
    %c0_6 = arith.constant 0 : index
    %6 = vector.load %arg4[%c0_5, %c0_6] : memref<32x128xbf16, #tpu.memory_space<vmem>>, vector<32x128xbf16>
    %7 = arith.extf %6 : vector<32x128xbf16> to vector<32x128xf32>
    %8 = arith.addf %5, %7 : vector<32x128xf32>
    %cst_7 = arith.constant 0.000000e+00 : f32
    %9 = vector.broadcast %cst_7 : f32 to vector<32x128xf32>
    %10 = arith.maximumf %8, %9 : vector<32x128xf32>
    %c0_8 = arith.constant 0 : index
    %c0_9 = arith.constant 0 : index
    %11 = vector.load %arg5[%c0_8, %c0_9] : memref<32x128xf32, #tpu.memory_space<vmem>>, vector<32x128xf32>
    tpu.vector_store %arg5[%c0_8, %c0_9], %10 {strides = array<i32>} : memref<32x128xf32, #tpu.memory_space<vmem>>, vector<32x128xf32>,
    return
  }
  func.func @transform_0(%arg0: i32) -> (i32, i32) {
    %c0_i32 = arith.constant 0 : i32
    %c0_i32_0 = arith.constant 0 : i32
    return %arg0, %c0_i32 : i32, i32
  }
  func.func @transform_1(%arg0: i32) -> (i32, i32) {
    %c0_i32 = arith.constant 0 : i32
    %c0_i32_0 = arith.constant 0 : i32
    %c0_i32_1 = arith.constant 0 : i32
    return %c0_i32, %c0_i32_0 : i32, i32
  }
  func.func @transform_2(%arg0: i32) -> (i32, i32) {
    %c0_i32 = arith.constant 0 : i32
    %c0_i32_0 = arith.constant 0 : i32
    %c0_i32_1 = arith.constant 0 : i32
    return %c0_i32, %c0_i32_0 : i32, i32
  }
  func.func @transform_3(%arg0: i32) -> (i32, i32) {
    %c0_i32 = arith.constant 0 : i32
    %c0_i32_0 = arith.constant 0 : i32
    return %arg0, %c0_i32 : i32, i32
  }
  func.func @transform_4(%arg0: i32) -> (i32, i32) {
    %c0_i32 = arith.constant 0 : i32
    %c0_i32_0 = arith.constant 0 : i32
    return %arg0, %c0_i32 : i32, i32
  }
}

</mosaic_0001>

<llo_original>
// kernel: basic_block_forward.2
$region0: #{basic_block_forward.2}
  #allocation0 [shape = 'u32[]', space=smem, size = 0x4, offset = 0x4, fixed_abs, tag = 'smem constant byte address 0x4 - core index']
  #allocation1 [shape = 'u32[144,128]{1,0:T(1,128)}', space=vmem, size = 0x12000, scoped, tag = 'internal scratch']
  %s0 = inlined_call_operand.vmem [shape: bf16[128,896], index: 0, kind: input, shape index: {}]
  %s1 = inlined_call_operand.vmem [shape: bf16[896,128], index: 1, kind: input, shape index: {}]
  %s2 = inlined_call_operand.vmem [shape: f32[1,128], index: 2, kind: input, shape index: {}]
  %s3 = inlined_call_operand.vmem [shape: bf16[128,128], index: 3, kind: output, shape index: {}]
  %s4 = sld [smem:[#allocation0]]
  $region45: #{basic_block_forward.2} parent=0
    _
  %s6 = ssub.s32 1, %s4
  %s7 = scalar_select 0, %s6, %s4
  loop: start=0, step=1, limit=6
  $region2: #{basic_block_forward.2} parent=0 // loop_pre_header
    _
  $region3: #{basic_block_forward.2} parent=0 // loop_header
    %s9 = sphi 0, %s13
    %p10 = scmp.ge.s32.totalorder %s9, 6
    %s19 = sphi 0, %s21
    %s22 = sphi 0, %s19
    %s23 = sphi 0, %s22
    %s39 = sphi 0, %s23
    %s43 = sphi 0, %s43
    %s45 = sphi 0, %s43
    %s46 = sphi 0, %s45
    %s60 = sphi 0, %s46
    %s64 = sphi 0, %s64
    %s66 = sphi 0, %s64
    %s67 = sphi 0, %s66
    %s81 = sphi 0, %s67
    %s87 = sphi 0, %s89
    %s90 = sphi 0, %s87
    %s91 = sphi 0, %s90
    %s107 = sphi 0, %s91
  $region4: #{basic_block_forward.2} parent=0 // loop_header_branch
    %12 = sbr.rel (%p10) target = $region8
  $region5: #{basic_block_forward.2} parent=0 // loop_body
    %s14 = ssub.s32 %s9, 1
    %s15 = ssub.s32 %s9, 2
    %s16 = sadd.s32 %s9, 1
    %s17 = ssub.s32 %s9, %s16
    %p18 = scmp.eq.s32.totalorder %s17, 0
    %s20 = sadd.s32 %s19, 1
    %s21 = scalar_select %p18, %s19, %s20
    %p24 = pneg %p18
    %p25 = scmp.eq.s32.totalorder %s9, 3
    %p26 = por %p24, %p25
    %p27 = scmp.ne.s32.totalorder %s19, %s22
    %p28 = scmp.eq.s32.totalorder %s9, 0
    %p29 = por %p27, %p28
    %p30 = scmp.ne.s32.totalorder %s19, %s22
    %p31 = scmp.eq.s32.totalorder %s14, 3
    %p32 = por %p30, %p31
    %p33 = scmp.ne.s32.totalorder %s22, %s23
    %p34 = scmp.eq.s32.totalorder %s14, 0
    %p35 = por %p33, %p34
    %p36 = scmp.ne.s32.totalorder %s22, %s23
    %p37 = scmp.eq.s32.totalorder %s15, 3
    %p38 = por %p36, %p37
    %p40 = scmp.ne.s32.totalorder %s23, %s39
    %p41 = scmp.eq.s32.totalorder %s15, 0
    %p42 = por %p40, %p41
    %s44 = sadd.s32 %s43, 1
    %p47 = scmp.eq.s32.totalorder %s9, 3
    %p48 = scmp.ne.s32.totalorder %s43, %s45
    %p49 = scmp.eq.s32.totalorder %s9, 0
    %p50 = por %p48, %p49
    %p51 = scmp.ne.s32.totalorder %s43, %s45
    %p52 = scmp.eq.s32.totalorder %s14, 3
    %p53 = por %p51, %p52
    %p54 = scmp.ne.s32.totalorder %s45, %s46
    %p55 = scmp.eq.s32.totalorder %s14, 0
    %p56 = por %p54, %p55
    %p57 = scmp.ne.s32.totalorder %s45, %s46
    %p58 = scmp.eq.s32.totalorder %s15, 3
    %p59 = por %p57, %p58
    %p61 = scmp.ne.s32.totalorder %s46, %s60
    %p62 = scmp.eq.s32.totalorder %s15, 0
    %p63 = por %p61, %p62
    %s65 = sadd.s32 %s64, 1
    %p68 = scmp.eq.s32.totalorder %s9, 3
    %p69 = scmp.ne.s32.totalorder %s64, %s66
    %p70 = scmp.eq.s32.totalorder %s9, 0
    %p71 = por %p69, %p70
    %p72 = scmp.ne.s32.totalorder %s64, %s66
    %p73 = scmp.eq.s32.totalorder %s14, 3
    %p74 = por %p72, %p73
    %p75 = scmp.ne.s32.totalorder %s66, %s67
    %p76 = scmp.eq.s32.totalorder %s14, 0
    %p77 = por %p75, %p76
    %p78 = scmp.ne.s32.totalorder %s66, %s67
    %p79 = scmp.eq.s32.totalorder %s15, 3
    %p80 = por %p78, %p79
    %p82 = scmp.ne.s32.totalorder %s67, %s81
    %p83 = scmp.eq.s32.totalorder %s15, 0
    %p84 = por %p82, %p83
    %s85 = ssub.s32 %s9, %s16
    %p86 = scmp.eq.s32.totalorder %s85, 0
    %s88 = sadd.s32 %s87, 1
    %s89 = scalar_select %p86, %s87, %s88
    %p92 = pneg %p86
    %p93 = scmp.eq.s32.totalorder %s9, 3
    %p94 = por %p92, %p93
    %p95 = scmp.ne.s32.totalorder %s87, %s90
    %p96 = scmp.eq.s32.totalorder %s9, 0
    %p97 = por %p95, %p96
    %p98 = scmp.ne.s32.totalorder %s87, %s90
    %p99 = scmp.eq.s32.totalorder %s14, 3
    %p100 = por %p98, %p99
    %p101 = scmp.ne.s32.totalorder %s90, %s91
    %p102 = scmp.eq.s32.totalorder %s14, 0
    %p103 = por %p101, %p102
    %p104 = scmp.ne.s32.totalorder %s90, %s91
    %p105 = scmp.eq.s32.totalorder %s15, 3
    %p106 = por %p104, %p105
    %p108 = scmp.ne.s32.totalorder %s91, %s107
    %p109 = scmp.eq.s32.totalorder %s15, 0
    %p110 = por %p108, %p109
    %p111 = scmp.le.s32.totalorder 1, %s9
    %p112 = scmp.lt.s32.totalorder %s9, 5
    %p113 = pnand %p111, %p112
    %p114 = pneg %p113
    // Predicated region
    $region9: #{basic_block_forward.2} parent=5 // pred_check
      _
    $region10: #{basic_block_forward.2} parent=5 // pred_check_branch
      %116 = sbr.rel (%p113) target = $region12
    $region11: #{basic_block_forward.2} parent=5 // pred_region
      %s117 = ssub.s32 %s9, 1
      // Predicated region
      $region13: #{basic_block_forward.2} parent=11 // pred_check
        %p118 = pneg %p56
      $region14: #{basic_block_forward.2} parent=11 // pred_check_branch
        %120 = sbr.rel (%p118) target = $region16
      $region15: #{basic_block_forward.2} parent=11 // pred_region
        _
      $region16: #{basic_block_forward.2} parent=11 // pred_fallthru
        _
      // Predicated region
      $region17: #{basic_block_forward.2} parent=11 // pred_check
        %p121 = pneg %p77
      $region18: #{basic_block_forward.2} parent=11 // pred_check_branch
        %123 = sbr.rel (%p121) target = $region20
      $region19: #{basic_block_forward.2} parent=11 // pred_region
        _
      $region20: #{basic_block_forward.2} parent=11 // pred_fallthru
        _
    $region12: #{basic_block_forward.2} parent=5 // pred_fallthru
      _
    %p124 = scmp.lt.s32.totalorder %s9, 4
    // Predicated region
    $region21: #{basic_block_forward.2} parent=5 // pred_check
      %p125 = pneg %p124
    $region22: #{basic_block_forward.2} parent=5 // pred_check_branch
      %127 = sbr.rel (%p125) target = $region24
    $region23: #{basic_block_forward.2} parent=5 // pred_region
      // Predicated region
      $region25: #{basic_block_forward.2} parent=23 // pred_check
        %p128 = pneg %p29
      $region26: #{basic_block_forward.2} parent=23 // pred_check_branch
        %130 = sbr.rel (%p128) target = $region28
      $region27: #{basic_block_forward.2} parent=23 // pred_region
        %s131 = smul.u32 4, %s9
        %p132 = scmp.lt.s32.totalorder %s131, 15
        %s133 = scalar_select %p132, %s131, 15
        %s134 = smul.addr %s133, 7
        %s135 = smul.addr %s134, 4
        %s136 = scalar_lea.vmem %s0, %s135
        %s137 = smul.u32 4, %s9
      $region28: #{basic_block_forward.2} parent=23 // pred_fallthru
        _
    $region24: #{basic_block_forward.2} parent=5 // pred_fallthru
      _
    %p138 = scmp.le.s32.totalorder 1, %s9
    %p139 = scmp.lt.s32.totalorder %s9, 5
    %p140 = pnand %p138, %p139
    %p141 = pneg %p140
    // Predicated region
    $region29: #{basic_block_forward.2} parent=5 // pred_check
      _
    $region30: #{basic_block_forward.2} parent=5 // pred_check_branch
      %143 = sbr.rel (%p140) target = $region32
    $region31: #{basic_block_forward.2} parent=5 // pred_region
      %s144 = ssub.s32 %s9, 1
      %s145 = smul.u32 4, %s14
      %p146 = scmp.lt.s32.totalorder %s145, 15
      %s147 = scalar_select %p146, %s145, 15
      %s148 = smul.addr %s147, 7
      %s149 = smul.addr %s148, 4
      %s150 = scalar_lea.vmem %s0, %s149
      %p151 = pneg %p35
      %p152 = pneg %p32
      %p153 = pneg %p56
      %p154 = pneg %p53
      %p155 = pneg %p77
      %p156 = pneg %p74
      %p157 = pneg %p103
      %p158 = pneg %p100
      %s159 = smul.u32 4, %s14
      %p160 = scmp.lt.s32.totalorder %s159, 15
      %s161 = scalar_select %p160, %s159, 15
      %s162 = smul.addr %s161, 4
      %s163 = scalar_lea.vmem %s3, %s162
      %s164 = smul.u32 4, %s14
      %p165 = scmp.lt.s32.totalorder %s164, 15
      %s166 = scalar_select %p165, %s164, 15
      %s167 = smul.addr %s166, 7
      %s168 = smul.addr %s167, 4
      %s169 = scalar_lea.vmem %s0, %s168
      %s170 = smul.u32 4, %s14
      %s171 = smul.u32 4, %s14
      %p172 = scmp.lt.s32.totalorder %s171, 15
      %s173 = scalar_select %p172, %s171, 15
      %s174 = smul.addr %s173, 4
      %s175 = scalar_lea.vmem %s3, %s174
      %s176 = smul.u32 4, %s14
      %v178 = vld [vmem:[%s169] sm:$0xff]
      %v179 = vld [vmem:[%s169 + $0x8] sm:$0xff]
      %v180 = vld [vmem:[%s169 + $0x10] sm:$0xff]
      %v181 = vld [vmem:[%s169 + $0x18] sm:$0xf]
      %v182 = vld [vmem:[%s169 + $0x1c] sm:$0xff]
      %v183 = vld [vmem:[%s169 + $0x24] sm:$0xff]
      %v184 = vld [vmem:[%s169 + $0x2c] sm:$0xff]
      %v185 = vld [vmem:[%s169 + $0x34] sm:$0xf]
      %v186 = vld [vmem:[%s169 + $0x38] sm:$0xff]
      %v187 = vld [vmem:[%s169 + $0x40] sm:$0xff]
      %v188 = vld [vmem:[%s169 + $0x48] sm:$0xff]
      %v189 = vld [vmem:[%s169 + $0x50] sm:$0xf]
      %v190 = vld [vmem:[%s169 + $0x54] sm:$0xff]
      %v191 = vld [vmem:[%s169 + $0x5c] sm:$0xff]
      %v192 = vld [vmem:[%s169 + $0x64] sm:$0xff]
      %v193 = vld [vmem:[%s169 + $0x6c] sm:$0xf]
      %v194 = vld [vmem:[%s1] sm:$0xf]
      %v195 = vld [vmem:[%s1 + $0x4] sm:$0xf]
      %v196 = vld [vmem:[%s1 + $0x8] sm:$0xf]
      %v197 = vld [vmem:[%s1 + $0xc] sm:$0xf]
      %v198 = vld [vmem:[%s1 + $0x10] sm:$0xf]
      %v199 = vld [vmem:[%s1 + $0x14] sm:$0xf]
      %v200 = vld [vmem:[%s1 + $0x18] sm:$0xf]
      %v201 = vld [vmem:[%s1 + $0x1c] sm:$0xf]
      %v202 = vld [vmem:[%s1 + $0x20] sm:$0xf]
      %v203 = vld [vmem:[%s1 + $0x24] sm:$0xf]
      %v204 = vld [vmem:[%s1 + $0x28] sm:$0xf]
      %v205 = vld [vmem:[%s1 + $0x2c] sm:$0xf]
      %v206 = vld [vmem:[%s1 + $0x30] sm:$0xf]
      %v207 = vld [vmem:[%s1 + $0x34] sm:$0xf]
      %v208 = vld [vmem:[%s1 + $0x38] sm:$0xf]
      %v209 = vld [vmem:[%s1 + $0x3c] sm:$0xf]
      %v210 = vld [vmem:[%s1 + $0x40] sm:$0xf]
      %v211 = vld [vmem:[%s1 + $0x44] sm:$0xf]
      %v212 = vld [vmem:[%s1 + $0x48] sm:$0xf]
      %v213 = vld [vmem:[%s1 + $0x4c] sm:$0xf]
      %v214 = vld [vmem:[%s1 + $0x50] sm:$0xf]
      %v215 = vld [vmem:[%s1 + $0x54] sm:$0xf]
      %v216 = vld [vmem:[%s1 + $0x58] sm:$0xf]
      %v217 = vld [vmem:[%s1 + $0x5c] sm:$0xf]
      %v218 = vld [vmem:[%s1 + $0x60] sm:$0xf]
      %v219 = vld [vmem:[%s1 + $0x64] sm:$0xf]
      %v220 = vld [vmem:[%s1 + $0x68] sm:$0xf]
      %v221 = vld [vmem:[%s1 + $0x6c] sm:$0xf]
      %v222 = vld [vmem:[%s1 + $0x70] sm:$0xf]
      %v223 = vld [vmem:[%s1 + $0x74] sm:$0xf]
      %v224 = vld [vmem:[%s1 + $0x78] sm:$0xf]
      %v225 = vld [vmem:[%s1 + $0x7c] sm:$0xf]
      %v226 = vld [vmem:[%s1 + $0x80] sm:$0xf]
      %v227 = vld [vmem:[%s1 + $0x84] sm:$0xf]
      %v228 = vld [vmem:[%s1 + $0x88] sm:$0xf]
      %v229 = vld [vmem:[%s1 + $0x8c] sm:$0xf]
      %v230 = vld [vmem:[%s1 + $0x90] sm:$0xf]
      %v231 = vld [vmem:[%s1 + $0x94] sm:$0xf]
      %v232 = vld [vmem:[%s1 + $0x98] sm:$0xf]
      %v233 = vld [vmem:[%s1 + $0x9c] sm:$0xf]
      %v234 = vld [vmem:[%s1 + $0xa0] sm:$0xf]
      %v235 = vld [vmem:[%s1 + $0xa4] sm:$0xf]
      %v236 = vld [vmem:[%s1 + $0xa8] sm:$0xf]
      %v237 = vld [vmem:[%s1 + $0xac] sm:$0xf]
      %v238 = vld [vmem:[%s1 + $0xb0] sm:$0xf]
      %v239 = vld [vmem:[%s1 + $0xb4] sm:$0xf]
      %v240 = vld [vmem:[%s1 + $0xb8] sm:$0xf]
      %v241 = vld [vmem:[%s1 + $0xbc] sm:$0xf]
      %v242 = vld [vmem:[%s1 + $0xc0] sm:$0xf]
      %v243 = vld [vmem:[%s1 + $0xc4] sm:$0xf]
      %v244 = vld [vmem:[%s1 + $0xc8] sm:$0xf]
      %v245 = vld [vmem:[%s1 + $0xcc] sm:$0xf]
      %v246 = vld [vmem:[%s1 + $0xd0] sm:$0xf]
      %v247 = vld [vmem:[%s1 + $0xd4] sm:$0xf]
      %v248 = vld [vmem:[%s1 + $0xd8] sm:$0xf]
      %v249 = vld [vmem:[%s1 + $0xdc] sm:$0xf]
      %v250 = vld [vmem:[%s1 + $0xe0] sm:$0xf]
      %v251 = vld [vmem:[%s1 + $0xe4] sm:$0xf]
      %v252 = vld [vmem:[%s1 + $0xe8] sm:$0xf]
      %v253 = vld [vmem:[%s1 + $0xec] sm:$0xf]
      %v254 = vld [vmem:[%s1 + $0xf0] sm:$0xf]
      %v255 = vld [vmem:[%s1 + $0xf4] sm:$0xf]
      %v256 = vld [vmem:[%s1 + $0xf8] sm:$0xf]
      %v257 = vld [vmem:[%s1 + $0xfc] sm:$0xf]
      %v258 = vld [vmem:[%s1 + $0x100] sm:$0xf]
      %v259 = vld [vmem:[%s1 + $0x104] sm:$0xf]
      %v260 = vld [vmem:[%s1 + $0x108] sm:$0xf]
      %v261 = vld [vmem:[%s1 + $0x10c] sm:$0xf]
      %v262 = vld [vmem:[%s1 + $0x110] sm:$0xf]
      %v263 = vld [vmem:[%s1 + $0x114] sm:$0xf]
      %v264 = vld [vmem:[%s1 + $0x118] sm:$0xf]
      %v265 = vld [vmem:[%s1 + $0x11c] sm:$0xf]
      %v266 = vld [vmem:[%s1 + $0x120] sm:$0xf]
      %v267 = vld [vmem:[%s1 + $0x124] sm:$0xf]
      %v268 = vld [vmem:[%s1 + $0x128] sm:$0xf]
      %v269 = vld [vmem:[%s1 + $0x12c] sm:$0xf]
      %v270 = vld [vmem:[%s1 + $0x130] sm:$0xf]
      %v271 = vld [vmem:[%s1 + $0x134] sm:$0xf]
      %v272 = vld [vmem:[%s1 + $0x138] sm:$0xf]
      %v273 = vld [vmem:[%s1 + $0x13c] sm:$0xf]
      %v274 = vld [vmem:[%s1 + $0x140] sm:$0xf]
      %v275 = vld [vmem:[%s1 + $0x144] sm:$0xf]
      %v276 = vld [vmem:[%s1 + $0x148] sm:$0xf]
      %v277 = vld [vmem:[%s1 + $0x14c] sm:$0xf]
      %v278 = vld [vmem:[%s1 + $0x150] sm:$0xf]
      %v279 = vld [vmem:[%s1 + $0x154] sm:$0xf]
      %v280 = vld [vmem:[%s1 + $0x158] sm:$0xf]
      %v281 = vld [vmem:[%s1 + $0x15c] sm:$0xf]
      %v282 = vld [vmem:[%s1 + $0x160] sm:$0xf]
      %v283 = vld [vmem:[%s1 + $0x164] sm:$0xf]
      %v284 = vld [vmem:[%s1 + $0x168] sm:$0xf]
      %v285 = vld [vmem:[%s1 + $0x16c] sm:$0xf]
      %v286 = vld [vmem:[%s1 + $0x170] sm:$0xf]
      %v287 = vld [vmem:[%s1 + $0x174] sm:$0xf]
      %v288 = vld [vmem:[%s1 + $0x178] sm:$0xf]
      %v289 = vld [vmem:[%s1 + $0x17c] sm:$0xf]
      %v290 = vld [vmem:[%s1 + $0x180] sm:$0xf]
      %v291 = vld [vmem:[%s1 + $0x184] sm:$0xf]
      %v292 = vld [vmem:[%s1 + $0x188] sm:$0xf]
      %v293 = vld [vmem:[%s1 + $0x18c] sm:$0xf]
      %v294 = vld [vmem:[%s1 + $0x190] sm:$0xf]
      %v295 = vld [vmem:[%s1 + $0x194] sm:$0xf]
      %v296 = vld [vmem:[%s1 + $0x198] sm:$0xf]
      %v297 = vld [vmem:[%s1 + $0x19c] sm:$0xf]
      %v298 = vld [vmem:[%s1 + $0x1a0] sm:$0xf]
      %v299 = vld [vmem:[%s1 + $0x1a4] sm:$0xf]
      %v300 = vld [vmem:[%s1 + $0x1a8] sm:$0xf]
      %v301 = vld [vmem:[%s1 + $0x1ac] sm:$0xf]
      %v302 = vld [vmem:[%s1 + $0x1b0] sm:$0xf]
      %v303 = vld [vmem:[%s1 + $0x1b4] sm:$0xf]
      %v304 = vld [vmem:[%s1 + $0x1b8] sm:$0xf]
      %v305 = vld [vmem:[%s1 + $0x1bc] sm:$0xf]
      %v306 = vld [vmem:[%s2] sm:$0x1]
      %v308 = vlaneseq
      %v309 = vshrl.u32 %v308, 7
      %v310 = vsub.s32 0, %v309
      %v311 = vrot.slane %v306, %v310
      %v329 = vunpack.c.l.b16 %v178
      %v330 = vunpack.c.h.b16 %v178
      %v331 = vunpack.c.l.b16 %v179
      %v332 = vunpack.c.h.b16 %v179
      %v333 = vunpack.c.l.b16 %v180
      %v334 = vunpack.c.h.b16 %v180
      %v335 = vunpack.c.l.b16 %v181
      %v336 = vunpack.c.l.b16 %v182
      %v337 = vunpack.c.h.b16 %v182
      %v338 = vunpack.c.l.b16 %v183
      %v339 = vunpack.c.h.b16 %v183
      %v340 = vunpack.c.l.b16 %v184
      %v341 = vunpack.c.h.b16 %v184
      %v342 = vunpack.c.l.b16 %v185
      %v343 = vunpack.c.l.b16 %v186
      %v344 = vunpack.c.h.b16 %v186
      %v345 = vunpack.c.l.b16 %v187
      %v346 = vunpack.c.h.b16 %v187
      %v347 = vunpack.c.l.b16 %v188
      %v348 = vunpack.c.h.b16 %v188
      %v349 = vunpack.c.l.b16 %v189
      %v350 = vunpack.c.l.b16 %v190
      %v351 = vunpack.c.h.b16 %v190
      %v352 = vunpack.c.l.b16 %v191
      %v353 = vunpack.c.h.b16 %v191
      %v354 = vunpack.c.l.b16 %v192
      %v355 = vunpack.c.h.b16 %v192
      %v356 = vunpack.c.l.b16 %v193
      %v357 = vpack.c.b16 %v336, %v329
      %v358 = vpack.c.b16 %v337, %v330
      %v359 = vpack.c.b16 %v338, %v331
      %v360 = vpack.c.b16 %v339, %v332
      %v361 = vpack.c.b16 %v340, %v333
      %v362 = vpack.c.b16 %v341, %v334
      %v363 = vpack.c.b16 %v342, %v335
      %v364 = vpack.c.b16 %v350, %v343
      %v365 = vpack.c.b16 %v351, %v344
      %v366 = vpack.c.b16 %v352, %v345
      %v367 = vpack.c.b16 %v353, %v346
      %v368 = vpack.c.b16 %v354, %v347
      %v369 = vpack.c.b16 %v355, %v348
      %v370 = vpack.c.b16 %v356, %v349
      %v497 = vunpack.c.l.b16 %v194
      %v498 = vunpack.c.l.b16 %v195
      %v499 = vunpack.c.l.b16 %v196
      %v500 = vunpack.c.l.b16 %v197
      %v501 = vunpack.c.l.b16 %v198
      %v502 = vunpack.c.l.b16 %v199
      %v503 = vunpack.c.l.b16 %v200
      %v504 = vunpack.c.l.b16 %v201
      %v505 = vunpack.c.l.b16 %v202
      %v506 = vunpack.c.l.b16 %v203
      %v507 = vunpack.c.l.b16 %v204
      %v508 = vunpack.c.l.b16 %v205
      %v509 = vunpack.c.l.b16 %v206
      %v510 = vunpack.c.l.b16 %v207
      %v511 = vunpack.c.l.b16 %v208
      %v512 = vunpack.c.l.b16 %v209
      %v513 = vunpack.c.l.b16 %v210
      %v514 = vunpack.c.l.b16 %v211
      %v515 = vunpack.c.l.b16 %v212
      %v516 = vunpack.c.l.b16 %v213
      %v517 = vunpack.c.l.b16 %v214
      %v518 = vunpack.c.l.b16 %v215
      %v519 = vunpack.c.l.b16 %v216
      %v520 = vunpack.c.l.b16 %v217
      %v521 = vunpack.c.l.b16 %v218
      %v522 = vunpack.c.l.b16 %v219
      %v523 = vunpack.c.l.b16 %v220
      %v524 = vunpack.c.l.b16 %v221
      %v525 = vunpack.c.l.b16 %v222
      %v526 = vunpack.c.l.b16 %v223
      %v527 = vunpack.c.l.b16 %v224
      %v528 = vunpack.c.l.b16 %v225
      %v529 = vunpack.c.l.b16 %v226
      %v530 = vunpack.c.l.b16 %v227
      %v531 = vunpack.c.l.b16 %v228
      %v532 = vunpack.c.l.b16 %v229
      %v533 = vunpack.c.l.b16 %v230
      %v534 = vunpack.c.l.b16 %v231
      %v535 = vunpack.c.l.b16 %v232
      %v536 = vunpack.c.l.b16 %v233
      %v537 = vunpack.c.l.b16 %v234
      %v538 = vunpack.c.l.b16 %v235
      %v539 = vunpack.c.l.b16 %v236
      %v540 = vunpack.c.l.b16 %v237
      %v541 = vunpack.c.l.b16 %v238
      %v542 = vunpack.c.l.b16 %v239
      %v543 = vunpack.c.l.b16 %v240
      %v544 = vunpack.c.l.b16 %v241
      %v545 = vunpack.c.l.b16 %v242
      %v546 = vunpack.c.l.b16 %v243
      %v547 = vunpack.c.l.b16 %v244
      %v548 = vunpack.c.l.b16 %v245
      %v549 = vunpack.c.l.b16 %v246
      %v550 = vunpack.c.l.b16 %v247
      %v551 = vunpack.c.l.b16 %v248
      %v552 = vunpack.c.l.b16 %v249
      %v553 = vunpack.c.l.b16 %v250
      %v554 = vunpack.c.l.b16 %v251
      %v555 = vunpack.c.l.b16 %v252
      %v556 = vunpack.c.l.b16 %v253
      %v557 = vunpack.c.l.b16 %v254
      %v558 = vunpack.c.l.b16 %v255
      %v559 = vunpack.c.l.b16 %v256
      %v560 = vunpack.c.l.b16 %v257
      %v561 = vunpack.c.l.b16 %v258
      %v562 = vunpack.c.l.b16 %v259
      %v563 = vunpack.c.l.b16 %v260
      %v564 = vunpack.c.l.b16 %v261
      %v565 = vunpack.c.l.b16 %v262
      %v566 = vunpack.c.l.b16 %v263
      %v567 = vunpack.c.l.b16 %v264
      %v568 = vunpack.c.l.b16 %v265
      %v569 = vunpack.c.l.b16 %v266
      %v570 = vunpack.c.l.b16 %v267
      %v571 = vunpack.c.l.b16 %v268
      %v572 = vunpack.c.l.b16 %v269
      %v573 = vunpack.c.l.b16 %v270
      %v574 = vunpack.c.l.b16 %v271
      %v575 = vunpack.c.l.b16 %v272
      %v576 = vunpack.c.l.b16 %v273
      %v577 = vunpack.c.l.b16 %v274
      %v578 = vunpack.c.l.b16 %v275
      %v579 = vunpack.c.l.b16 %v276
      %v580 = vunpack.c.l.b16 %v277
      %v581 = vunpack.c.l.b16 %v278
      %v582 = vunpack.c.l.b16 %v279
      %v583 = vunpack.c.l.b16 %v280
      %v584 = vunpack.c.l.b16 %v281
      %v585 = vunpack.c.l.b16 %v282
      %v586 = vunpack.c.l.b16 %v283
      %v587 = vunpack.c.l.b16 %v284
      %v588 = vunpack.c.l.b16 %v285
      %v589 = vunpack.c.l.b16 %v286
      %v590 = vunpack.c.l.b16 %v287
      %v591 = vunpack.c.l.b16 %v288
      %v592 = vunpack.c.l.b16 %v289
      %v593 = vunpack.c.l.b16 %v290
      %v594 = vunpack.c.l.b16 %v291
      %v595 = vunpack.c.l.b16 %v292
      %v596 = vunpack.c.l.b16 %v293
      %v597 = vunpack.c.l.b16 %v294
      %v598 = vunpack.c.l.b16 %v295
      %v599 = vunpack.c.l.b16 %v296
      %v600 = vunpack.c.l.b16 %v297
      %v601 = vunpack.c.l.b16 %v298
      %v602 = vunpack.c.l.b16 %v299
      %v603 = vunpack.c.l.b16 %v300
      %v604 = vunpack.c.l.b16 %v301
      %v605 = vunpack.c.l.b16 %v302
      %v606 = vunpack.c.l.b16 %v303
      %v607 = vunpack.c.l.b16 %v304
      %v608 = vunpack.c.l.b16 %v305
      %v609 = vpack.c.b16 %v498, %v497
      %v610 = vpack.c.b16 %v500, %v499
      %v611 = vpack.c.b16 %v502, %v501
      %v612 = vpack.c.b16 %v504, %v503
      %v613 = vpack.c.b16 %v506, %v505
      %v614 = vpack.c.b16 %v508, %v507
      %v615 = vpack.c.b16 %v510, %v509
      %v616 = vpack.c.b16 %v512, %v511
      %v617 = vpack.c.b16 %v514, %v513
      %v618 = vpack.c.b16 %v516, %v515
      %v619 = vpack.c.b16 %v518, %v517
      %v620 = vpack.c.b16 %v520, %v519
      %v621 = vpack.c.b16 %v522, %v521
      %v622 = vpack.c.b16 %v524, %v523
      %v623 = vpack.c.b16 %v526, %v525
      %v624 = vpack.c.b16 %v528, %v527
      %v625 = vpack.c.b16 %v530, %v529
      %v626 = vpack.c.b16 %v532, %v531
      %v627 = vpack.c.b16 %v534, %v533
      %v628 = vpack.c.b16 %v536, %v535
      %v629 = vpack.c.b16 %v538, %v537
      %v630 = vpack.c.b16 %v540, %v539
      %v631 = vpack.c.b16 %v542, %v541
      %v632 = vpack.c.b16 %v544, %v543
      %v633 = vpack.c.b16 %v546, %v545
      %v634 = vpack.c.b16 %v548, %v547
      %v635 = vpack.c.b16 %v550, %v549
      %v636 = vpack.c.b16 %v552, %v551
      %v637 = vpack.c.b16 %v554, %v553
      %v638 = vpack.c.b16 %v556, %v555
      %v639 = vpack.c.b16 %v558, %v557
      %v640 = vpack.c.b16 %v560, %v559
      %v641 = vpack.c.b16 %v562, %v561
      %v642 = vpack.c.b16 %v564, %v563
      %v643 = vpack.c.b16 %v566, %v565
      %v644 = vpack.c.b16 %v568, %v567
      %v645 = vpack.c.b16 %v570, %v569
      %v646 = vpack.c.b16 %v572, %v571
      %v647 = vpack.c.b16 %v574, %v573
      %v648 = vpack.c.b16 %v576, %v575
      %v649 = vpack.c.b16 %v578, %v577
      %v650 = vpack.c.b16 %v580, %v579
      %v651 = vpack.c.b16 %v582, %v581
      %v652 = vpack.c.b16 %v584, %v583
      %v653 = vpack.c.b16 %v586, %v585
      %v654 = vpack.c.b16 %v588, %v587
      %v655 = vpack.c.b16 %v590, %v589
      %v656 = vpack.c.b16 %v592, %v591
      %v657 = vpack.c.b16 %v594, %v593
      %v658 = vpack.c.b16 %v596, %v595
      %v659 = vpack.c.b16 %v598, %v597
      %v660 = vpack.c.b16 %v600, %v599
      %v661 = vpack.c.b16 %v602, %v601
      %v662 = vpack.c.b16 %v604, %v603
      %v663 = vpack.c.b16 %v606, %v605
      %v664 = vpack.c.b16 %v608, %v607
      %721 = vmatprep.subr.bf16.mxu0 0
      %722 = vmatpush1.bf16.msra.mxu0 %v609
      %723 = vmatprep.subr.bf16.mxu0 0
      %724 = vmatpush1.bf16.msra.mxu0 %v610
      %725 = vmatprep.subr.bf16.mxu0 0
      %726 = vmatpush1.bf16.msra.mxu0 %v611
      %727 = vmatprep.subr.bf16.mxu0 0
      %728 = vmatpush1.bf16.msra.mxu0 %v612
      %729 = vmatprep.subr.bf16.mxu0 0
      %730 = vmatpush1.bf16.msra.mxu0 %v613
      %731 = vmatprep.subr.bf16.mxu0 0
      %732 = vmatpush1.bf16.msra.mxu0 %v614
      %733 = vmatprep.subr.bf16.mxu0 0
      %734 = vmatpush1.bf16.msra.mxu0 %v615
      %735 = vmatprep.subr.bf16.mxu0 0
      %736 = vmatpush1.bf16.msra.mxu0 %v616
      %737 = vmatprep.subr.bf16.mxu0 0
      %738 = vmatpush1.bf16.msra.mxu0 %v617
      %739 = vmatprep.subr.bf16.mxu0 0
      %740 = vmatpush1.bf16.msra.mxu0 %v618
      %741 = vmatprep.subr.bf16.mxu0 0
      %742 = vmatpush1.bf16.msra.mxu0 %v619
      %743 = vmatprep.subr.bf16.mxu0 0
      %744 = vmatpush1.bf16.msra.mxu0 %v620
      %745 = vmatprep.subr.bf16.mxu0 0
      %746 = vmatpush1.bf16.msra.mxu0 %v621
      %747 = vmatprep.subr.bf16.mxu0 0
      %748 = vmatpush1.bf16.msra.mxu0 %v622
      %749 = vmatprep.subr.bf16.mxu0 0
      %750 = vmatpush1.bf16.msra.mxu0 %v623
      %751 = vmatprep.subr.bf16.mxu0 0
      %752 = vmatpush1.bf16.msra.mxu0 %v624
      %753 = vmatprep.mubr.bf16.mxu0 %v358
      %754 = vmatmul.mubr.bf16.gmra.mrb[0].mxu0 %v357
      %v755 = vpop.f32.mrb[0].mxu0
      %v756 = vadd.f32 %v311, %v755
      %v757 = vpop.f32.mrb[0].mxu0
      %v758 = vpop.f32.mrb[0].mxu0
      %v759 = vadd.f32 %v311, %v758
      %v760 = vpop.f32.mrb[0].mxu0
      %761 = vmatprep.mubr.bf16.mxu0 %v365
      %762 = vmatmul.mubr.bf16.gmra.mrb[0].mxu0 %v364
      %v763 = vpop.f32.mrb[0].mxu0
      %v764 = vadd.f32 %v311, %v763
      %v765 = vpop.f32.mrb[0].mxu0
      %v766 = vpop.f32.mrb[0].mxu0
      %v767 = vadd.f32 %v311, %v766
      %v768 = vpop.f32.mrb[0].mxu0
      %769 = vdwg.mxu0
      %770 = vmatprep.subr.bf16.mxu0 0
      %771 = vmatpush1.bf16.msra.mxu0 %v625
      %772 = vmatprep.subr.bf16.mxu0 0
      %773 = vmatpush1.bf16.msra.mxu0 %v626
      %774 = vmatprep.subr.bf16.mxu0 0
      %775 = vmatpush1.bf16.msra.mxu0 %v627
      %776 = vmatprep.subr.bf16.mxu0 0
      %777 = vmatpush1.bf16.msra.mxu0 %v628
      %778 = vmatprep.subr.bf16.mxu0 0
      %779 = vmatpush1.bf16.msra.mxu0 %v629
      %780 = vmatprep.subr.bf16.mxu0 0
      %781 = vmatpush1.bf16.msra.mxu0 %v630
      %782 = vmatprep.subr.bf16.mxu0 0
      %783 = vmatpush1.bf16.msra.mxu0 %v631
      %784 = vmatprep.subr.bf16.mxu0 0
      %785 = vmatpush1.bf16.msra.mxu0 %v632
      %786 = vmatprep.subr.bf16.mxu0 0
      %787 = vmatpush1.bf16.msra.mxu0 %v633
      %788 = vmatprep.subr.bf16.mxu0 0
      %789 = vmatpush1.bf16.msra.mxu0 %v634
      %790 = vmatprep.subr.bf16.mxu0 0
      %791 = vmatpush1.bf16.msra.mxu0 %v635
      %792 = vmatprep.subr.bf16.mxu0 0
      %793 = vmatpush1.bf16.msra.mxu0 %v636
      %794 = vmatprep.subr.bf16.mxu0 0
      %795 = vmatpush1.bf16.msra.mxu0 %v637
      %796 = vmatprep.subr.bf16.mxu0 0
      %797 = vmatpush1.bf16.msra.mxu0 %v638
      %798 = vmatprep.subr.bf16.mxu0 0
      %799 = vmatpush1.bf16.msra.mxu0 %v639
      %800 = vmatprep.subr.bf16.mxu0 0
      %801 = vmatpush1.bf16.msra.mxu0 %v640
      %802 = vmatprep.mubr.bf16.mxu0 %v360
      %803 = vmatmul.mubr.bf16.gmra.mrb[0].mxu0 %v359
      %v804 = vpop.f32.mrb[0].mxu0
      %v805 = vadd.f32 %v756, %v804
      %v806 = vpop.f32.mrb[0].mxu0
      %v807 = vpop.f32.mrb[0].mxu0
      %v808 = vadd.f32 %v759, %v807
      %v809 = vpop.f32.mrb[0].mxu0
      %810 = vmatprep.mubr.bf16.mxu0 %v367
      %811 = vmatmul.mubr.bf16.gmra.mrb[0].mxu0 %v366
      %v812 = vpop.f32.mrb[0].mxu0
      %v813 = vadd.f32 %v764, %v812
      %v814 = vpop.f32.mrb[0].mxu0
      %v815 = vpop.f32.mrb[0].mxu0
      %v816 = vadd.f32 %v767, %v815
      %v817 = vpop.f32.mrb[0].mxu0
      %818 = vdwg.mxu0
      %819 = vmatprep.subr.bf16.mxu0 0
      %820 = vmatpush1.bf16.msra.mxu0 %v641
      %821 = vmatprep.subr.bf16.mxu0 0
      %822 = vmatpush1.bf16.msra.mxu0 %v642
      %823 = vmatprep.subr.bf16.mxu0 0
      %824 = vmatpush1.bf16.msra.mxu0 %v643
      %825 = vmatprep.subr.bf16.mxu0 0
      %826 = vmatpush1.bf16.msra.mxu0 %v644
      %827 = vmatprep.subr.bf16.mxu0 0
      %828 = vmatpush1.bf16.msra.mxu0 %v645
      %829 = vmatprep.subr.bf16.mxu0 0
      %830 = vmatpush1.bf16.msra.mxu0 %v646
      %831 = vmatprep.subr.bf16.mxu0 0
      %832 = vmatpush1.bf16.msra.mxu0 %v647
      %833 = vmatprep.subr.bf16.mxu0 0
      %834 = vmatpush1.bf16.msra.mxu0 %v648
      %835 = vmatprep.subr.bf16.mxu0 0
      %836 = vmatpush1.bf16.msra.mxu0 %v649
      %837 = vmatprep.subr.bf16.mxu0 0
      %838 = vmatpush1.bf16.msra.mxu0 %v650
      %839 = vmatprep.subr.bf16.mxu0 0
      %840 = vmatpush1.bf16.msra.mxu0 %v651
      %841 = vmatprep.subr.bf16.mxu0 0
      %842 = vmatpush1.bf16.msra.mxu0 %v652
      %843 = vmatprep.subr.bf16.mxu0 0
      %844 = vmatpush1.bf16.msra.mxu0 %v653
      %845 = vmatprep.subr.bf16.mxu0 0
      %846 = vmatpush1.bf16.msra.mxu0 %v654
      %847 = vmatprep.subr.bf16.mxu0 0
      %848 = vmatpush1.bf16.msra.mxu0 %v655
      %849 = vmatprep.subr.bf16.mxu0 0
      %850 = vmatpush1.bf16.msra.mxu0 %v656
      %851 = vmatprep.mubr.bf16.mxu0 %v362
      %852 = vmatmul.mubr.bf16.gmra.mrb[0].mxu0 %v361
      %v853 = vpop.f32.mrb[0].mxu0
      %v854 = vadd.f32 %v805, %v853
      %v855 = vpop.f32.mrb[0].mxu0
      %v856 = vpop.f32.mrb[0].mxu0
      %v857 = vadd.f32 %v808, %v856
      %v858 = vpop.f32.mrb[0].mxu0
      %859 = vmatprep.mubr.bf16.mxu0 %v369
      %860 = vmatmul.mubr.bf16.gmra.mrb[0].mxu0 %v368
      %v861 = vpop.f32.mrb[0].mxu0
      %v862 = vadd.f32 %v813, %v861
      %v863 = vpop.f32.mrb[0].mxu0
      %v864 = vpop.f32.mrb[0].mxu0
      %v865 = vadd.f32 %v816, %v864
      %v866 = vpop.f32.mrb[0].mxu0
      %867 = vdwg.mxu0
      %868 = vmatprep.subr.bf16.mxu0 0
      %869 = vmatpush1.bf16.msra.mxu0 %v657
      %870 = vmatprep.subr.bf16.mxu0 0
      %871 = vmatpush1.bf16.msra.mxu0 %v658
      %872 = vmatprep.subr.bf16.mxu0 0
      %873 = vmatpush1.bf16.msra.mxu0 %v659
      %874 = vmatprep.subr.bf16.mxu0 0
      %875 = vmatpush1.bf16.msra.mxu0 %v660
      %876 = vmatprep.subr.bf16.mxu0 0
      %877 = vmatpush1.bf16.msra.mxu0 %v661
      %878 = vmatprep.subr.bf16.mxu0 0
      %879 = vmatpush1.bf16.msra.mxu0 %v662
      %880 = vmatprep.subr.bf16.mxu0 0
      %881 = vmatpush1.bf16.msra.mxu0 %v663
      %882 = vmatprep.subr.bf16.mxu0 0
      %883 = vmatpush1.bf16.msra.mxu0 %v664
      %884 = vmatprep.subr.bf16.mxu0 0
      %885 = vmatpush1.bf16.msra.mxu0 0
      %886 = vmatprep.subr.bf16.mxu0 0
      %887 = vmatpush1.bf16.msra.mxu0 0
      %888 = vmatprep.subr.bf16.mxu0 0
      %889 = vmatpush1.bf16.msra.mxu0 0
      %890 = vmatprep.subr.bf16.mxu0 0
      %891 = vmatpush1.bf16.msra.mxu0 0
      %892 = vmatprep.subr.bf16.mxu0 0
      %893 = vmatpush1.bf16.msra.mxu0 0
      %894 = vmatprep.subr.bf16.mxu0 0
      %895 = vmatpush1.bf16.msra.mxu0 0
      %896 = vmatprep.subr.bf16.mxu0 0
      %897 = vmatpush1.bf16.msra.mxu0 0
      %898 = vmatprep.subr.bf16.mxu0 0
      %899 = vmatpush1.bf16.msra.mxu0 0
      %900 = vmatprep.mubr.bf16.mxu0 0
      %901 = vmatmul.mubr.bf16.gmra.mrb[0].mxu0 %v363
      %v902 = vpop.f32.mrb[0].mxu0
      %v903 = vadd.f32 %v854, %v902
      %v904 = vpop.f32.mrb[0].mxu0
      %v905 = vpop.f32.mrb[0].mxu0
      %v906 = vadd.f32 %v857, %v905
      %v907 = vpop.f32.mrb[0].mxu0
      %908 = vmatprep.mubr.bf16.mxu0 0
      %909 = vmatmul.mubr.bf16.gmra.mrb[0].mxu0 %v370
      %v910 = vpop.f32.mrb[0].mxu0
      %v911 = vadd.f32 %v862, %v910
      %v912 = vpop.f32.mrb[0].mxu0
      %v913 = vpop.f32.mrb[0].mxu0
      %v914 = vadd.f32 %v865, %v913
      %v915 = vpop.f32.mrb[0].mxu0
      %916 = vdwg.mxu0
      %v917 = vmax.f32 %v903, 0.0
      %v918 = vmax.f32 %v906, 0.0
      %v919 = vmax.f32 %v911, 0.0
      %v920 = vmax.f32 %v914, 0.0
      %v921 = vpack.c.bf16 %v918, %v917
      %v922 = vpack.c.bf16 %v920, %v919
      %v925 = vunpack.c.l.b16 %v921
      %v926 = vunpack.c.h.b16 %v921
      %v927 = vunpack.c.l.b16 %v922
      %v928 = vunpack.c.h.b16 %v922
      %v929 = vpack.c.b16 %v925, %v925
      %v930 = vpack.c.b16 %v926, %v926
      %v931 = vpack.c.b16 %v927, %v927
      %v932 = vpack.c.b16 %v928, %v928
      %937 = vst [vmem:[%s175] sm:$0xf] %v929
      %938 = vst [vmem:[%s175 + $0x4] sm:$0xf] %v930
      %939 = vst [vmem:[%s175 + $0x8] sm:$0xf] %v931
      %940 = vst [vmem:[%s175 + $0xc] sm:$0xf] %v932
      %s941 = smul.u32 4, %s14
      %p942 = scmp.lt.s32.totalorder %s941, 15
      %s943 = scalar_select %p942, %s941, 15
      %s944 = smul.addr %s943, 4
      %s945 = scalar_lea.vmem %s3, %s944
      // Predicated region
      $region33: #{basic_block_forward.2} parent=31 // pred_check
        %p946 = pneg %p100
      $region34: #{basic_block_forward.2} parent=31 // pred_check_branch
        %948 = sbr.rel (%p946) target = $region36
      $region35: #{basic_block_forward.2} parent=31 // pred_region
        %s949 = smul.u32 4, %s14
      $region36: #{basic_block_forward.2} parent=31 // pred_fallthru
        _
    $region32: #{basic_block_forward.2} parent=5 // pred_fallthru
      _
    %p950 = scmp.le.s32.totalorder 2, %s9
    // Predicated region
    $region37: #{basic_block_forward.2} parent=5 // pred_check
      %p951 = pneg %p950
    $region38: #{basic_block_forward.2} parent=5 // pred_check_branch
      %953 = sbr.rel (%p951) target = $region40
    $region39: #{basic_block_forward.2} parent=5 // pred_region
      %s954 = ssub.s32 %s9, 2
      // Predicated region
      $region41: #{basic_block_forward.2} parent=39 // pred_check
        %p955 = pneg %p106
      $region42: #{basic_block_forward.2} parent=39 // pred_check_branch
        %957 = sbr.rel (%p955) target = $region44
      $region43: #{basic_block_forward.2} parent=39 // pred_region
        %s958 = smul.u32 4, %s15
        %p959 = scmp.lt.s32.totalorder %s958, 15
        %s960 = scalar_select %p959, %s958, 15
        %s961 = smul.addr %s960, 4
        %s962 = scalar_lea.vmem %s3, %s961
      $region44: #{basic_block_forward.2} parent=39 // pred_fallthru
        _
    $region40: #{basic_block_forward.2} parent=5 // pred_fallthru
      _
  $region6: #{basic_block_forward.2} parent=0 // loop_footer
    %s13 = sadd.s32 1, %s9
  $region7: #{basic_block_forward.2} parent=0 // loop_footer_branch
    %8 = sbr.rel target = $region3
  $region8: #{basic_block_forward.2} parent=0 // loop_exit
    _

// kernel: basic_block_forward.3
$region0: #{basic_block_forward.3}
  #allocation0 [shape = 'u32[]', space=smem, size = 0x4, offset = 0x4, fixed_abs, tag = 'smem constant byte address 0x4 - core index']
  #allocation1 [shape = 'u32[144,128]{1,0:T(1,128)}', space=vmem, size = 0x12000, scoped, tag = 'internal scratch']
  %s0 = inlined_call_operand.vmem [shape: bf16[128,896], index: 0, kind: input, shape index: {}]
  %s1 = inlined_call_operand.vmem [shape: bf16[896,128], index: 1, kind: input, shape index: {}]
  %s2 = inlined_call_operand.vmem [shape: f32[1,128], index: 2, kind: input, shape index: {}]
  %s3 = inlined_call_operand.vmem [shape: bf16[128,128], index: 3, kind: input, shape index: {}]
  %s4 = inlined_call_operand.vmem [shape: f32[128,128], index: 4, kind: output, shape index: {}]
  %s5 = sld [smem:[#allocation0]]
  $region49: #{basic_block_forward.3} parent=0
    _
  %s7 = ssub.s32 1, %s5
  %s8 = scalar_select 0, %s7, %s5
  loop: start=0, step=1, limit=6
  $region2: #{basic_block_forward.3} parent=0 // loop_pre_header
    _
  $region3: #{basic_block_forward.3} parent=0 // loop_header
    %s10 = sphi 0, %s14
    %p11 = scmp.ge.s32.totalorder %s10, 6
    %s20 = sphi 0, %s22
    %s23 = sphi 0, %s20
    %s24 = sphi 0, %s23
    %s40 = sphi 0, %s24
    %s44 = sphi 0, %s44
    %s46 = sphi 0, %s44
    %s47 = sphi 0, %s46
    %s61 = sphi 0, %s47
    %s65 = sphi 0, %s65
    %s67 = sphi 0, %s65
    %s68 = sphi 0, %s67
    %s82 = sphi 0, %s68
    %s88 = sphi 0, %s90
    %s91 = sphi 0, %s88
    %s92 = sphi 0, %s91
    %s108 = sphi 0, %s92
    %s114 = sphi 0, %s116
    %s117 = sphi 0, %s114
    %s118 = sphi 0, %s117
    %s134 = sphi 0, %s118
  $region4: #{basic_block_forward.3} parent=0 // loop_header_branch
    %13 = sbr.rel (%p11) target = $region8
  $region5: #{basic_block_forward.3} parent=0 // loop_body
    %s15 = ssub.s32 %s10, 1
    %s16 = ssub.s32 %s10, 2
    %s17 = sadd.s32 %s10, 1
    %s18 = ssub.s32 %s10, %s17
    %p19 = scmp.eq.s32.totalorder %s18, 0
    %s21 = sadd.s32 %s20, 1
    %s22 = scalar_select %p19, %s20, %s21
    %p25 = pneg %p19
    %p26 = scmp.eq.s32.totalorder %s10, 3
    %p27 = por %p25, %p26
    %p28 = scmp.ne.s32.totalorder %s20, %s23
    %p29 = scmp.eq.s32.totalorder %s10, 0
    %p30 = por %p28, %p29
    %p31 = scmp.ne.s32.totalorder %s20, %s23
    %p32 = scmp.eq.s32.totalorder %s15, 3
    %p33 = por %p31, %p32
    %p34 = scmp.ne.s32.totalorder %s23, %s24
    %p35 = scmp.eq.s32.totalorder %s15, 0
    %p36 = por %p34, %p35
    %p37 = scmp.ne.s32.totalorder %s23, %s24
    %p38 = scmp.eq.s32.totalorder %s16, 3
    %p39 = por %p37, %p38
    %p41 = scmp.ne.s32.totalorder %s24, %s40
    %p42 = scmp.eq.s32.totalorder %s16, 0
    %p43 = por %p41, %p42
    %s45 = sadd.s32 %s44, 1
    %p48 = scmp.eq.s32.totalorder %s10, 3
    %p49 = scmp.ne.s32.totalorder %s44, %s46
    %p50 = scmp.eq.s32.totalorder %s10, 0
    %p51 = por %p49, %p50
    %p52 = scmp.ne.s32.totalorder %s44, %s46
    %p53 = scmp.eq.s32.totalorder %s15, 3
    %p54 = por %p52, %p53
    %p55 = scmp.ne.s32.totalorder %s46, %s47
    %p56 = scmp.eq.s32.totalorder %s15, 0
    %p57 = por %p55, %p56
    %p58 = scmp.ne.s32.totalorder %s46, %s47
    %p59 = scmp.eq.s32.totalorder %s16, 3
    %p60 = por %p58, %p59
    %p62 = scmp.ne.s32.totalorder %s47, %s61
    %p63 = scmp.eq.s32.totalorder %s16, 0
    %p64 = por %p62, %p63
    %s66 = sadd.s32 %s65, 1
    %p69 = scmp.eq.s32.totalorder %s10, 3
    %p70 = scmp.ne.s32.totalorder %s65, %s67
    %p71 = scmp.eq.s32.totalorder %s10, 0
    %p72 = por %p70, %p71
    %p73 = scmp.ne.s32.totalorder %s65, %s67
    %p74 = scmp.eq.s32.totalorder %s15, 3
    %p75 = por %p73, %p74
    %p76 = scmp.ne.s32.totalorder %s67, %s68
    %p77 = scmp.eq.s32.totalorder %s15, 0
    %p78 = por %p76, %p77
    %p79 = scmp.ne.s32.totalorder %s67, %s68
    %p80 = scmp.eq.s32.totalorder %s16, 3
    %p81 = por %p79, %p80
    %p83 = scmp.ne.s32.totalorder %s68, %s82
    %p84 = scmp.eq.s32.totalorder %s16, 0
    %p85 = por %p83, %p84
    %s86 = ssub.s32 %s10, %s17
    %p87 = scmp.eq.s32.totalorder %s86, 0
    %s89 = sadd.s32 %s88, 1
    %s90 = scalar_select %p87, %s88, %s89
    %p93 = pneg %p87
    %p94 = scmp.eq.s32.totalorder %s10, 3
    %p95 = por %p93, %p94
    %p96 = scmp.ne.s32.totalorder %s88, %s91
    %p97 = scmp.eq.s32.totalorder %s10, 0
    %p98 = por %p96, %p97
    %p99 = scmp.ne.s32.totalorder %s88, %s91
    %p100 = scmp.eq.s32.totalorder %s15, 3
    %p101 = por %p99, %p100
    %p102 = scmp.ne.s32.totalorder %s91, %s92
    %p103 = scmp.eq.s32.totalorder %s15, 0
    %p104 = por %p102, %p103
    %p105 = scmp.ne.s32.totalorder %s91, %s92
    %p106 = scmp.eq.s32.totalorder %s16, 3
    %p107 = por %p105, %p106
    %p109 = scmp.ne.s32.totalorder %s92, %s108
    %p110 = scmp.eq.s32.totalorder %s16, 0
    %p111 = por %p109, %p110
    %s112 = ssub.s32 %s10, %s17
    %p113 = scmp.eq.s32.totalorder %s112, 0
    %s115 = sadd.s32 %s114, 1
    %s116 = scalar_select %p113, %s114, %s115
    %p119 = pneg %p113
    %p120 = scmp.eq.s32.totalorder %s10, 3
    %p121 = por %p119, %p120
    %p122 = scmp.ne.s32.totalorder %s114, %s117
    %p123 = scmp.eq.s32.totalorder %s10, 0
    %p124 = por %p122, %p123
    %p125 = scmp.ne.s32.totalorder %s114, %s117
    %p126 = scmp.eq.s32.totalorder %s15, 3
    %p127 = por %p125, %p126
    %p128 = scmp.ne.s32.totalorder %s117, %s118
    %p129 = scmp.eq.s32.totalorder %s15, 0
    %p130 = por %p128, %p129
    %p131 = scmp.ne.s32.totalorder %s117, %s118
    %p132 = scmp.eq.s32.totalorder %s16, 3
    %p133 = por %p131, %p132
    %p135 = scmp.ne.s32.totalorder %s118, %s134
    %p136 = scmp.eq.s32.totalorder %s16, 0
    %p137 = por %p135, %p136
    %p138 = scmp.le.s32.totalorder 1, %s10
    %p139 = scmp.lt.s32.totalorder %s10, 5
    %p140 = pnand %p138, %p139
    %p141 = pneg %p140
    // Predicated region
    $region9: #{basic_block_forward.3} parent=5 // pred_check
      _
    $region10: #{basic_block_forward.3} parent=5 // pred_check_branch
      %143 = sbr.rel (%p140) target = $region12
    $region11: #{basic_block_forward.3} parent=5 // pred_region
      %s144 = ssub.s32 %s10, 1
      // Predicated region
      $region13: #{basic_block_forward.3} parent=11 // pred_check
        %p145 = pneg %p57
      $region14: #{basic_block_forward.3} parent=11 // pred_check_branch
        %147 = sbr.rel (%p145) target = $region16
      $region15: #{basic_block_forward.3} parent=11 // pred_region
        _
      $region16: #{basic_block_forward.3} parent=11 // pred_fallthru
        _
      // Predicated region
      $region17: #{basic_block_forward.3} parent=11 // pred_check
        %p148 = pneg %p78
      $region18: #{basic_block_forward.3} parent=11 // pred_check_branch
        %150 = sbr.rel (%p148) target = $region20
      $region19: #{basic_block_forward.3} parent=11 // pred_region
        _
      $region20: #{basic_block_forward.3} parent=11 // pred_fallthru
        _
    $region12: #{basic_block_forward.3} parent=5 // pred_fallthru
      _
    %p151 = scmp.lt.s32.totalorder %s10, 4
    // Predicated region
    $region21: #{basic_block_forward.3} parent=5 // pred_check
      %p152 = pneg %p151
    $region22: #{basic_block_forward.3} parent=5 // pred_check_branch
      %154 = sbr.rel (%p152) target = $region24
    $region23: #{basic_block_forward.3} parent=5 // pred_region
      // Predicated region
      $region25: #{basic_block_forward.3} parent=23 // pred_check
        %p155 = pneg %p30
      $region26: #{basic_block_forward.3} parent=23 // pred_check_branch
        %157 = sbr.rel (%p155) target = $region28
      $region27: #{basic_block_forward.3} parent=23 // pred_region
        %s158 = smul.u32 4, %s10
        %p159 = scmp.lt.s32.totalorder %s158, 15
        %s160 = scalar_select %p159, %s158, 15
        %s161 = smul.addr %s160, 7
        %s162 = smul.addr %s161, 4
        %s163 = scalar_lea.vmem %s0, %s162
        %s164 = smul.u32 4, %s10
      $region28: #{basic_block_forward.3} parent=23 // pred_fallthru
        _
      // Predicated region
      $region29: #{basic_block_forward.3} parent=23 // pred_check
        %p165 = pneg %p98
      $region30: #{basic_block_forward.3} parent=23 // pred_check_branch
        %167 = sbr.rel (%p165) target = $region32
      $region31: #{basic_block_forward.3} parent=23 // pred_region
        %s168 = smul.u32 4, %s10
        %p169 = scmp.lt.s32.totalorder %s168, 15
        %s170 = scalar_select %p169, %s168, 15
        %s171 = smul.addr %s170, 4
        %s172 = scalar_lea.vmem %s3, %s171
        %s173 = smul.u32 4, %s10
      $region32: #{basic_block_forward.3} parent=23 // pred_fallthru
        _
    $region24: #{basic_block_forward.3} parent=5 // pred_fallthru
      _
    %p174 = scmp.le.s32.totalorder 1, %s10
    %p175 = scmp.lt.s32.totalorder %s10, 5
    %p176 = pnand %p174, %p175
    %p177 = pneg %p176
    // Predicated region
    $region33: #{basic_block_forward.3} parent=5 // pred_check
      _
    $region34: #{basic_block_forward.3} parent=5 // pred_check_branch
      %179 = sbr.rel (%p176) target = $region36
    $region35: #{basic_block_forward.3} parent=5 // pred_region
      %s180 = ssub.s32 %s10, 1
      %s181 = smul.u32 4, %s15
      %p182 = scmp.lt.s32.totalorder %s181, 15
      %s183 = scalar_select %p182, %s181, 15
      %s184 = smul.addr %s183, 7
      %s185 = smul.addr %s184, 4
      %s186 = scalar_lea.vmem %s0, %s185
      %p187 = pneg %p36
      %p188 = pneg %p33
      %p189 = pneg %p57
      %p190 = pneg %p54
      %p191 = pneg %p78
      %p192 = pneg %p75
      %s193 = smul.u32 4, %s15
      %p194 = scmp.lt.s32.totalorder %s193, 15
      %s195 = scalar_select %p194, %s193, 15
      %s196 = smul.addr %s195, 4
      %s197 = scalar_lea.vmem %s3, %s196
      %p198 = pneg %p104
      %p199 = pneg %p101
      %p200 = pneg %p130
      %p201 = pneg %p127
      %s202 = smul.u32 4, %s15
      %p203 = scmp.lt.s32.totalorder %s202, 15
      %s204 = scalar_select %p203, %s202, 15
      %s205 = smul.addr %s204, 8
      %s206 = scalar_lea.vmem %s4, %s205
      %s207 = smul.u32 4, %s15
      %p208 = scmp.lt.s32.totalorder %s207, 15
      %s209 = scalar_select %p208, %s207, 15
      %s210 = smul.addr %s209, 7
      %s211 = smul.addr %s210, 4
      %s212 = scalar_lea.vmem %s0, %s211
      %s213 = smul.u32 4, %s15
      %s214 = smul.u32 4, %s15
      %p215 = scmp.lt.s32.totalorder %s214, 15
      %s216 = scalar_select %p215, %s214, 15
      %s217 = smul.addr %s216, 4
      %s218 = scalar_lea.vmem %s3, %s217
      %s219 = smul.u32 4, %s15
      %s220 = smul.u32 4, %s15
      %p221 = scmp.lt.s32.totalorder %s220, 15
      %s222 = scalar_select %p221, %s220, 15
      %s223 = smul.addr %s222, 8
      %s224 = scalar_lea.vmem %s4, %s223
      %s225 = smul.u32 4, %s15
      %v227 = vld [vmem:[%s212] sm:$0xff]
      %v228 = vld [vmem:[%s212 + $0x8] sm:$0xff]
      %v229 = vld [vmem:[%s212 + $0x10] sm:$0xff]
      %v230 = vld [vmem:[%s212 + $0x18] sm:$0xf]
      %v231 = vld [vmem:[%s212 + $0x1c] sm:$0xff]
      %v232 = vld [vmem:[%s212 + $0x24] sm:$0xff]
      %v233 = vld [vmem:[%s212 + $0x2c] sm:$0xff]
      %v234 = vld [vmem:[%s212 + $0x34] sm:$0xf]
      %v235 = vld [vmem:[%s212 + $0x38] sm:$0xff]
      %v236 = vld [vmem:[%s212 + $0x40] sm:$0xff]
      %v237 = vld [vmem:[%s212 + $0x48] sm:$0xff]
      %v238 = vld [vmem:[%s212 + $0x50] sm:$0xf]
      %v239 = vld [vmem:[%s212 + $0x54] sm:$0xff]
      %v240 = vld [vmem:[%s212 + $0x5c] sm:$0xff]
      %v241 = vld [vmem:[%s212 + $0x64] sm:$0xff]
      %v242 = vld [vmem:[%s212 + $0x6c] sm:$0xf]
      %v243 = vld [vmem:[%s1] sm:$0xf]
      %v244 = vld [vmem:[%s1 + $0x4] sm:$0xf]
      %v245 = vld [vmem:[%s1 + $0x8] sm:$0xf]
      %v246 = vld [vmem:[%s1 + $0xc] sm:$0xf]
      %v247 = vld [vmem:[%s1 + $0x10] sm:$0xf]
      %v248 = vld [vmem:[%s1 + $0x14] sm:$0xf]
      %v249 = vld [vmem:[%s1 + $0x18] sm:$0xf]
      %v250 = vld [vmem:[%s1 + $0x1c] sm:$0xf]
      %v251 = vld [vmem:[%s1 + $0x20] sm:$0xf]
      %v252 = vld [vmem:[%s1 + $0x24] sm:$0xf]
      %v253 = vld [vmem:[%s1 + $0x28] sm:$0xf]
      %v254 = vld [vmem:[%s1 + $0x2c] sm:$0xf]
      %v255 = vld [vmem:[%s1 + $0x30] sm:$0xf]
      %v256 = vld [vmem:[%s1 + $0x34] sm:$0xf]
      %v257 = vld [vmem:[%s1 + $0x38] sm:$0xf]
      %v258 = vld [vmem:[%s1 + $0x3c] sm:$0xf]
      %v259 = vld [vmem:[%s1 + $0x40] sm:$0xf]
      %v260 = vld [vmem:[%s1 + $0x44] sm:$0xf]
      %v261 = vld [vmem:[%s1 + $0x48] sm:$0xf]
      %v262 = vld [vmem:[%s1 + $0x4c] sm:$0xf]
      %v263 = vld [vmem:[%s1 + $0x50] sm:$0xf]
      %v264 = vld [vmem:[%s1 + $0x54] sm:$0xf]
      %v265 = vld [vmem:[%s1 + $0x58] sm:$0xf]
      %v266 = vld [vmem:[%s1 + $0x5c] sm:$0xf]
      %v267 = vld [vmem:[%s1 + $0x60] sm:$0xf]
      %v268 = vld [vmem:[%s1 + $0x64] sm:$0xf]
      %v269 = vld [vmem:[%s1 + $0x68] sm:$0xf]
      %v270 = vld [vmem:[%s1 + $0x6c] sm:$0xf]
      %v271 = vld [vmem:[%s1 + $0x70] sm:$0xf]
      %v272 = vld [vmem:[%s1 + $0x74] sm:$0xf]
      %v273 = vld [vmem:[%s1 + $0x78] sm:$0xf]
      %v274 = vld [vmem:[%s1 + $0x7c] sm:$0xf]
      %v275 = vld [vmem:[%s1 + $0x80] sm:$0xf]
      %v276 = vld [vmem:[%s1 + $0x84] sm:$0xf]
      %v277 = vld [vmem:[%s1 + $0x88] sm:$0xf]
      %v278 = vld [vmem:[%s1 + $0x8c] sm:$0xf]
      %v279 = vld [vmem:[%s1 + $0x90] sm:$0xf]
      %v280 = vld [vmem:[%s1 + $0x94] sm:$0xf]
      %v281 = vld [vmem:[%s1 + $0x98] sm:$0xf]
      %v282 = vld [vmem:[%s1 + $0x9c] sm:$0xf]
      %v283 = vld [vmem:[%s1 + $0xa0] sm:$0xf]
      %v284 = vld [vmem:[%s1 + $0xa4] sm:$0xf]
      %v285 = vld [vmem:[%s1 + $0xa8] sm:$0xf]
      %v286 = vld [vmem:[%s1 + $0xac] sm:$0xf]
      %v287 = vld [vmem:[%s1 + $0xb0] sm:$0xf]
      %v288 = vld [vmem:[%s1 + $0xb4] sm:$0xf]
      %v289 = vld [vmem:[%s1 + $0xb8] sm:$0xf]
      %v290 = vld [vmem:[%s1 + $0xbc] sm:$0xf]
      %v291 = vld [vmem:[%s1 + $0xc0] sm:$0xf]
      %v292 = vld [vmem:[%s1 + $0xc4] sm:$0xf]
      %v293 = vld [vmem:[%s1 + $0xc8] sm:$0xf]
      %v294 = vld [vmem:[%s1 + $0xcc] sm:$0xf]
      %v295 = vld [vmem:[%s1 + $0xd0] sm:$0xf]
      %v296 = vld [vmem:[%s1 + $0xd4] sm:$0xf]
      %v297 = vld [vmem:[%s1 + $0xd8] sm:$0xf]
      %v298 = vld [vmem:[%s1 + $0xdc] sm:$0xf]
      %v299 = vld [vmem:[%s1 + $0xe0] sm:$0xf]
      %v300 = vld [vmem:[%s1 + $0xe4] sm:$0xf]
      %v301 = vld [vmem:[%s1 + $0xe8] sm:$0xf]
      %v302 = vld [vmem:[%s1 + $0xec] sm:$0xf]
      %v303 = vld [vmem:[%s1 + $0xf0] sm:$0xf]
      %v304 = vld [vmem:[%s1 + $0xf4] sm:$0xf]
      %v305 = vld [vmem:[%s1 + $0xf8] sm:$0xf]
      %v306 = vld [vmem:[%s1 + $0xfc] sm:$0xf]
      %v307 = vld [vmem:[%s1 + $0x100] sm:$0xf]
      %v308 = vld [vmem:[%s1 + $0x104] sm:$0xf]
      %v309 = vld [vmem:[%s1 + $0x108] sm:$0xf]
      %v310 = vld [vmem:[%s1 + $0x10c] sm:$0xf]
      %v311 = vld [vmem:[%s1 + $0x110] sm:$0xf]
      %v312 = vld [vmem:[%s1 + $0x114] sm:$0xf]
      %v313 = vld [vmem:[%s1 + $0x118] sm:$0xf]
      %v314 = vld [vmem:[%s1 + $0x11c] sm:$0xf]
      %v315 = vld [vmem:[%s1 + $0x120] sm:$0xf]
      %v316 = vld [vmem:[%s1 + $0x124] sm:$0xf]
      %v317 = vld [vmem:[%s1 + $0x128] sm:$0xf]
      %v318 = vld [vmem:[%s1 + $0x12c] sm:$0xf]
      %v319 = vld [vmem:[%s1 + $0x130] sm:$0xf]
      %v320 = vld [vmem:[%s1 + $0x134] sm:$0xf]
      %v321 = vld [vmem:[%s1 + $0x138] sm:$0xf]
      %v322 = vld [vmem:[%s1 + $0x13c] sm:$0xf]
      %v323 = vld [vmem:[%s1 + $0x140] sm:$0xf]
      %v324 = vld [vmem:[%s1 + $0x144] sm:$0xf]
      %v325 = vld [vmem:[%s1 + $0x148] sm:$0xf]
      %v326 = vld [vmem:[%s1 + $0x14c] sm:$0xf]
      %v327 = vld [vmem:[%s1 + $0x150] sm:$0xf]
      %v328 = vld [vmem:[%s1 + $0x154] sm:$0xf]
      %v329 = vld [vmem:[%s1 + $0x158] sm:$0xf]
      %v330 = vld [vmem:[%s1 + $0x15c] sm:$0xf]
      %v331 = vld [vmem:[%s1 + $0x160] sm:$0xf]
      %v332 = vld [vmem:[%s1 + $0x164] sm:$0xf]
      %v333 = vld [vmem:[%s1 + $0x168] sm:$0xf]
      %v334 = vld [vmem:[%s1 + $0x16c] sm:$0xf]
      %v335 = vld [vmem:[%s1 + $0x170] sm:$0xf]
      %v336 = vld [vmem:[%s1 + $0x174] sm:$0xf]
      %v337 = vld [vmem:[%s1 + $0x178] sm:$0xf]
      %v338 = vld [vmem:[%s1 + $0x17c] sm:$0xf]
      %v339 = vld [vmem:[%s1 + $0x180] sm:$0xf]
      %v340 = vld [vmem:[%s1 + $0x184] sm:$0xf]
      %v341 = vld [vmem:[%s1 + $0x188] sm:$0xf]
      %v342 = vld [vmem:[%s1 + $0x18c] sm:$0xf]
      %v343 = vld [vmem:[%s1 + $0x190] sm:$0xf]
      %v344 = vld [vmem:[%s1 + $0x194] sm:$0xf]
      %v345 = vld [vmem:[%s1 + $0x198] sm:$0xf]
      %v346 = vld [vmem:[%s1 + $0x19c] sm:$0xf]
      %v347 = vld [vmem:[%s1 + $0x1a0] sm:$0xf]
      %v348 = vld [vmem:[%s1 + $0x1a4] sm:$0xf]
      %v349 = vld [vmem:[%s1 + $0x1a8] sm:$0xf]
      %v350 = vld [vmem:[%s1 + $0x1ac] sm:$0xf]
      %v351 = vld [vmem:[%s1 + $0x1b0] sm:$0xf]
      %v352 = vld [vmem:[%s1 + $0x1b4] sm:$0xf]
      %v353 = vld [vmem:[%s1 + $0x1b8] sm:$0xf]
      %v354 = vld [vmem:[%s1 + $0x1bc] sm:$0xf]
      %v355 = vld [vmem:[%s2] sm:$0x1]
      %v357 = vlaneseq
      %v358 = vshrl.u32 %v357, 7
      %v359 = vsub.s32 0, %v358
      %v360 = vrot.slane %v355, %v359
      %v378 = vunpack.c.l.b16 %v227
      %v379 = vunpack.c.h.b16 %v227
      %v380 = vunpack.c.l.b16 %v228
      %v381 = vunpack.c.h.b16 %v228
      %v382 = vunpack.c.l.b16 %v229
      %v383 = vunpack.c.h.b16 %v229
      %v384 = vunpack.c.l.b16 %v230
      %v385 = vunpack.c.l.b16 %v231
      %v386 = vunpack.c.h.b16 %v231
      %v387 = vunpack.c.l.b16 %v232
      %v388 = vunpack.c.h.b16 %v232
      %v389 = vunpack.c.l.b16 %v233
      %v390 = vunpack.c.h.b16 %v233
      %v391 = vunpack.c.l.b16 %v234
      %v392 = vunpack.c.l.b16 %v235
      %v393 = vunpack.c.h.b16 %v235
      %v394 = vunpack.c.l.b16 %v236
      %v395 = vunpack.c.h.b16 %v236
      %v396 = vunpack.c.l.b16 %v237
      %v397 = vunpack.c.h.b16 %v237
      %v398 = vunpack.c.l.b16 %v238
      %v399 = vunpack.c.l.b16 %v239
      %v400 = vunpack.c.h.b16 %v239
      %v401 = vunpack.c.l.b16 %v240
      %v402 = vunpack.c.h.b16 %v240
      %v403 = vunpack.c.l.b16 %v241
      %v404 = vunpack.c.h.b16 %v241
      %v405 = vunpack.c.l.b16 %v242
      %v406 = vpack.c.b16 %v385, %v378
      %v407 = vpack.c.b16 %v386, %v379
      %v408 = vpack.c.b16 %v387, %v380
      %v409 = vpack.c.b16 %v388, %v381
      %v410 = vpack.c.b16 %v389, %v382
      %v411 = vpack.c.b16 %v390, %v383
      %v412 = vpack.c.b16 %v391, %v384
      %v413 = vpack.c.b16 %v399, %v392
      %v414 = vpack.c.b16 %v400, %v393
      %v415 = vpack.c.b16 %v401, %v394
      %v416 = vpack.c.b16 %v402, %v395
      %v417 = vpack.c.b16 %v403, %v396
      %v418 = vpack.c.b16 %v404, %v397
      %v419 = vpack.c.b16 %v405, %v398
      %v546 = vunpack.c.l.b16 %v243
      %v547 = vunpack.c.l.b16 %v244
      %v548 = vunpack.c.l.b16 %v245
      %v549 = vunpack.c.l.b16 %v246
      %v550 = vunpack.c.l.b16 %v247
      %v551 = vunpack.c.l.b16 %v248
      %v552 = vunpack.c.l.b16 %v249
      %v553 = vunpack.c.l.b16 %v250
      %v554 = vunpack.c.l.b16 %v251
      %v555 = vunpack.c.l.b16 %v252
      %v556 = vunpack.c.l.b16 %v253
      %v557 = vunpack.c.l.b16 %v254
      %v558 = vunpack.c.l.b16 %v255
      %v559 = vunpack.c.l.b16 %v256
      %v560 = vunpack.c.l.b16 %v257
      %v561 = vunpack.c.l.b16 %v258
      %v562 = vunpack.c.l.b16 %v259
      %v563 = vunpack.c.l.b16 %v260
      %v564 = vunpack.c.l.b16 %v261
      %v565 = vunpack.c.l.b16 %v262
      %v566 = vunpack.c.l.b16 %v263
      %v567 = vunpack.c.l.b16 %v264
      %v568 = vunpack.c.l.b16 %v265
      %v569 = vunpack.c.l.b16 %v266
      %v570 = vunpack.c.l.b16 %v267
      %v571 = vunpack.c.l.b16 %v268
      %v572 = vunpack.c.l.b16 %v269
      %v573 = vunpack.c.l.b16 %v270
      %v574 = vunpack.c.l.b16 %v271
      %v575 = vunpack.c.l.b16 %v272
      %v576 = vunpack.c.l.b16 %v273
      %v577 = vunpack.c.l.b16 %v274
      %v578 = vunpack.c.l.b16 %v275
      %v579 = vunpack.c.l.b16 %v276
      %v580 = vunpack.c.l.b16 %v277
      %v581 = vunpack.c.l.b16 %v278
      %v582 = vunpack.c.l.b16 %v279
      %v583 = vunpack.c.l.b16 %v280
      %v584 = vunpack.c.l.b16 %v281
      %v585 = vunpack.c.l.b16 %v282
      %v586 = vunpack.c.l.b16 %v283
      %v587 = vunpack.c.l.b16 %v284
      %v588 = vunpack.c.l.b16 %v285
      %v589 = vunpack.c.l.b16 %v286
      %v590 = vunpack.c.l.b16 %v287
      %v591 = vunpack.c.l.b16 %v288
      %v592 = vunpack.c.l.b16 %v289
      %v593 = vunpack.c.l.b16 %v290
      %v594 = vunpack.c.l.b16 %v291
      %v595 = vunpack.c.l.b16 %v292
      %v596 = vunpack.c.l.b16 %v293
      %v597 = vunpack.c.l.b16 %v294
      %v598 = vunpack.c.l.b16 %v295
      %v599 = vunpack.c.l.b16 %v296
      %v600 = vunpack.c.l.b16 %v297
      %v601 = vunpack.c.l.b16 %v298
      %v602 = vunpack.c.l.b16 %v299
      %v603 = vunpack.c.l.b16 %v300
      %v604 = vunpack.c.l.b16 %v301
      %v605 = vunpack.c.l.b16 %v302
      %v606 = vunpack.c.l.b16 %v303
      %v607 = vunpack.c.l.b16 %v304
      %v608 = vunpack.c.l.b16 %v305
      %v609 = vunpack.c.l.b16 %v306
      %v610 = vunpack.c.l.b16 %v307
      %v611 = vunpack.c.l.b16 %v308
      %v612 = vunpack.c.l.b16 %v309
      %v613 = vunpack.c.l.b16 %v310
      %v614 = vunpack.c.l.b16 %v311
      %v615 = vunpack.c.l.b16 %v312
      %v616 = vunpack.c.l.b16 %v313
      %v617 = vunpack.c.l.b16 %v314
      %v618 = vunpack.c.l.b16 %v315
      %v619 = vunpack.c.l.b16 %v316
      %v620 = vunpack.c.l.b16 %v317
      %v621 = vunpack.c.l.b16 %v318
      %v622 = vunpack.c.l.b16 %v319
      %v623 = vunpack.c.l.b16 %v320
      %v624 = vunpack.c.l.b16 %v321
      %v625 = vunpack.c.l.b16 %v322
      %v626 = vunpack.c.l.b16 %v323
      %v627 = vunpack.c.l.b16 %v324
      %v628 = vunpack.c.l.b16 %v325
      %v629 = vunpack.c.l.b16 %v326
      %v630 = vunpack.c.l.b16 %v327
      %v631 = vunpack.c.l.b16 %v328
      %v632 = vunpack.c.l.b16 %v329
      %v633 = vunpack.c.l.b16 %v330
      %v634 = vunpack.c.l.b16 %v331
      %v635 = vunpack.c.l.b16 %v332
      %v636 = vunpack.c.l.b16 %v333
      %v637 = vunpack.c.l.b16 %v334
      %v638 = vunpack.c.l.b16 %v335
      %v639 = vunpack.c.l.b16 %v336
      %v640 = vunpack.c.l.b16 %v337
      %v641 = vunpack.c.l.b16 %v338
      %v642 = vunpack.c.l.b16 %v339
      %v643 = vunpack.c.l.b16 %v340
      %v644 = vunpack.c.l.b16 %v341
      %v645 = vunpack.c.l.b16 %v342
      %v646 = vunpack.c.l.b16 %v343
      %v647 = vunpack.c.l.b16 %v344
      %v648 = vunpack.c.l.b16 %v345
      %v649 = vunpack.c.l.b16 %v346
      %v650 = vunpack.c.l.b16 %v347
      %v651 = vunpack.c.l.b16 %v348
      %v652 = vunpack.c.l.b16 %v349
      %v653 = vunpack.c.l.b16 %v350
      %v654 = vunpack.c.l.b16 %v351
      %v655 = vunpack.c.l.b16 %v352
      %v656 = vunpack.c.l.b16 %v353
      %v657 = vunpack.c.l.b16 %v354
      %v658 = vpack.c.b16 %v547, %v546
      %v659 = vpack.c.b16 %v549, %v548
      %v660 = vpack.c.b16 %v551, %v550
      %v661 = vpack.c.b16 %v553, %v552
      %v662 = vpack.c.b16 %v555, %v554
      %v663 = vpack.c.b16 %v557, %v556
      %v664 = vpack.c.b16 %v559, %v558
      %v665 = vpack.c.b16 %v561, %v560
      %v666 = vpack.c.b16 %v563, %v562
      %v667 = vpack.c.b16 %v565, %v564
      %v668 = vpack.c.b16 %v567, %v566
      %v669 = vpack.c.b16 %v569, %v568
      %v670 = vpack.c.b16 %v571, %v570
      %v671 = vpack.c.b16 %v573, %v572
      %v672 = vpack.c.b16 %v575, %v574
      %v673 = vpack.c.b16 %v577, %v576
      %v674 = vpack.c.b16 %v579, %v578
      %v675 = vpack.c.b16 %v581, %v580
      %v676 = vpack.c.b16 %v583, %v582
      %v677 = vpack.c.b16 %v585, %v584
      %v678 = vpack.c.b16 %v587, %v586
      %v679 = vpack.c.b16 %v589, %v588
      %v680 = vpack.c.b16 %v591, %v590
      %v681 = vpack.c.b16 %v593, %v592
      %v682 = vpack.c.b16 %v595, %v594
      %v683 = vpack.c.b16 %v597, %v596
      %v684 = vpack.c.b16 %v599, %v598
      %v685 = vpack.c.b16 %v601, %v600
      %v686 = vpack.c.b16 %v603, %v602
      %v687 = vpack.c.b16 %v605, %v604
      %v688 = vpack.c.b16 %v607, %v606
      %v689 = vpack.c.b16 %v609, %v608
      %v690 = vpack.c.b16 %v611, %v610
      %v691 = vpack.c.b16 %v613, %v612
      %v692 = vpack.c.b16 %v615, %v614
      %v693 = vpack.c.b16 %v617, %v616
      %v694 = vpack.c.b16 %v619, %v618
      %v695 = vpack.c.b16 %v621, %v620
      %v696 = vpack.c.b16 %v623, %v622
      %v697 = vpack.c.b16 %v625, %v624
      %v698 = vpack.c.b16 %v627, %v626
      %v699 = vpack.c.b16 %v629, %v628
      %v700 = vpack.c.b16 %v631, %v630
      %v701 = vpack.c.b16 %v633, %v632
      %v702 = vpack.c.b16 %v635, %v634
      %v703 = vpack.c.b16 %v637, %v636
      %v704 = vpack.c.b16 %v639, %v638
      %v705 = vpack.c.b16 %v641, %v640
      %v706 = vpack.c.b16 %v643, %v642
      %v707 = vpack.c.b16 %v645, %v644
      %v708 = vpack.c.b16 %v647, %v646
      %v709 = vpack.c.b16 %v649, %v648
      %v710 = vpack.c.b16 %v651, %v650
      %v711 = vpack.c.b16 %v653, %v652
      %v712 = vpack.c.b16 %v655, %v654
      %v713 = vpack.c.b16 %v657, %v656
      %770 = vmatprep.subr.bf16.mxu0 0
      %771 = vmatpush1.bf16.msra.mxu0 %v658
      %772 = vmatprep.subr.bf16.mxu0 0
      %773 = vmatpush1.bf16.msra.mxu0 %v659
      %774 = vmatprep.subr.bf16.mxu0 0
      %775 = vmatpush1.bf16.msra.mxu0 %v660
      %776 = vmatprep.subr.bf16.mxu0 0
      %777 = vmatpush1.bf16.msra.mxu0 %v661
      %778 = vmatprep.subr.bf16.mxu0 0
      %779 = vmatpush1.bf16.msra.mxu0 %v662
      %780 = vmatprep.subr.bf16.mxu0 0
      %781 = vmatpush1.bf16.msra.mxu0 %v663
      %782 = vmatprep.subr.bf16.mxu0 0
      %783 = vmatpush1.bf16.msra.mxu0 %v664
      %784 = vmatprep.subr.bf16.mxu0 0
      %785 = vmatpush1.bf16.msra.mxu0 %v665
      %786 = vmatprep.subr.bf16.mxu0 0
      %787 = vmatpush1.bf16.msra.mxu0 %v666
      %788 = vmatprep.subr.bf16.mxu0 0
      %789 = vmatpush1.bf16.msra.mxu0 %v667
      %790 = vmatprep.subr.bf16.mxu0 0
      %791 = vmatpush1.bf16.msra.mxu0 %v668
      %792 = vmatprep.subr.bf16.mxu0 0
      %793 = vmatpush1.bf16.msra.mxu0 %v669
      %794 = vmatprep.subr.bf16.mxu0 0
      %795 = vmatpush1.bf16.msra.mxu0 %v670
      %796 = vmatprep.subr.bf16.mxu0 0
      %797 = vmatpush1.bf16.msra.mxu0 %v671
      %798 = vmatprep.subr.bf16.mxu0 0
      %799 = vmatpush1.bf16.msra.mxu0 %v672
      %800 = vmatprep.subr.bf16.mxu0 0
      %801 = vmatpush1.bf16.msra.mxu0 %v673
      %802 = vmatprep.mubr.bf16.mxu0 %v407
      %803 = vmatmul.mubr.bf16.gmra.mrb[0].mxu0 %v406
      %v804 = vpop.f32.mrb[0].mxu0
      %v805 = vadd.f32 %v360, %v804
      %v806 = vpop.f32.mrb[0].mxu0
      %v807 = vpop.f32.mrb[0].mxu0
      %v808 = vadd.f32 %v360, %v807
      %v809 = vpop.f32.mrb[0].mxu0
      %810 = vmatprep.mubr.bf16.mxu0 %v414
      %811 = vmatmul.mubr.bf16.gmra.mrb[0].mxu0 %v413
      %v812 = vpop.f32.mrb[0].mxu0
      %v813 = vadd.f32 %v360, %v812
      %v814 = vpop.f32.mrb[0].mxu0
      %v815 = vpop.f32.mrb[0].mxu0
      %v816 = vadd.f32 %v360, %v815
      %v817 = vpop.f32.mrb[0].mxu0
      %818 = vdwg.mxu0
      %819 = vmatprep.subr.bf16.mxu0 0
      %820 = vmatpush1.bf16.msra.mxu0 %v674
      %821 = vmatprep.subr.bf16.mxu0 0
      %822 = vmatpush1.bf16.msra.mxu0 %v675
      %823 = vmatprep.subr.bf16.mxu0 0
      %824 = vmatpush1.bf16.msra.mxu0 %v676
      %825 = vmatprep.subr.bf16.mxu0 0
      %826 = vmatpush1.bf16.msra.mxu0 %v677
      %827 = vmatprep.subr.bf16.mxu0 0
      %828 = vmatpush1.bf16.msra.mxu0 %v678
      %829 = vmatprep.subr.bf16.mxu0 0
      %830 = vmatpush1.bf16.msra.mxu0 %v679
      %831 = vmatprep.subr.bf16.mxu0 0
      %832 = vmatpush1.bf16.msra.mxu0 %v680
      %833 = vmatprep.subr.bf16.mxu0 0
      %834 = vmatpush1.bf16.msra.mxu0 %v681
      %835 = vmatprep.subr.bf16.mxu0 0
      %836 = vmatpush1.bf16.msra.mxu0 %v682
      %837 = vmatprep.subr.bf16.mxu0 0
      %838 = vmatpush1.bf16.msra.mxu0 %v683
      %839 = vmatprep.subr.bf16.mxu0 0
      %840 = vmatpush1.bf16.msra.mxu0 %v684
      %841 = vmatprep.subr.bf16.mxu0 0
      %842 = vmatpush1.bf16.msra.mxu0 %v685
      %843 = vmatprep.subr.bf16.mxu0 0
      %844 = vmatpush1.bf16.msra.mxu0 %v686
      %845 = vmatprep.subr.bf16.mxu0 0
      %846 = vmatpush1.bf16.msra.mxu0 %v687
      %847 = vmatprep.subr.bf16.mxu0 0
      %848 = vmatpush1.bf16.msra.mxu0 %v688
      %849 = vmatprep.subr.bf16.mxu0 0
      %850 = vmatpush1.bf16.msra.mxu0 %v689
      %851 = vmatprep.mubr.bf16.mxu0 %v409
      %852 = vmatmul.mubr.bf16.gmra.mrb[0].mxu0 %v408
      %v853 = vpop.f32.mrb[0].mxu0
      %v854 = vadd.f32 %v805, %v853
      %v855 = vpop.f32.mrb[0].mxu0
      %v856 = vpop.f32.mrb[0].mxu0
      %v857 = vadd.f32 %v808, %v856
      %v858 = vpop.f32.mrb[0].mxu0
      %859 = vmatprep.mubr.bf16.mxu0 %v416
      %860 = vmatmul.mubr.bf16.gmra.mrb[0].mxu0 %v415
      %v861 = vpop.f32.mrb[0].mxu0
      %v862 = vadd.f32 %v813, %v861
      %v863 = vpop.f32.mrb[0].mxu0
      %v864 = vpop.f32.mrb[0].mxu0
      %v865 = vadd.f32 %v816, %v864
      %v866 = vpop.f32.mrb[0].mxu0
      %867 = vdwg.mxu0
      %868 = vmatprep.subr.bf16.mxu0 0
      %869 = vmatpush1.bf16.msra.mxu0 %v690
      %870 = vmatprep.subr.bf16.mxu0 0
      %871 = vmatpush1.bf16.msra.mxu0 %v691
      %872 = vmatprep.subr.bf16.mxu0 0
      %873 = vmatpush1.bf16.msra.mxu0 %v692
      %874 = vmatprep.subr.bf16.mxu0 0
      %875 = vmatpush1.bf16.msra.mxu0 %v693
      %876 = vmatprep.subr.bf16.mxu0 0
      %877 = vmatpush1.bf16.msra.mxu0 %v694
      %878 = vmatprep.subr.bf16.mxu0 0
      %879 = vmatpush1.bf16.msra.mxu0 %v695
      %880 = vmatprep.subr.bf16.mxu0 0
      %881 = vmatpush1.bf16.msra.mxu0 %v696
      %882 = vmatprep.subr.bf16.mxu0 0
      %883 = vmatpush1.bf16.msra.mxu0 %v697
      %884 = vmatprep.subr.bf16.mxu0 0
      %885 = vmatpush1.bf16.msra.mxu0 %v698
      %886 = vmatprep.subr.bf16.mxu0 0
      %887 = vmatpush1.bf16.msra.mxu0 %v699
      %888 = vmatprep.subr.bf16.mxu0 0
      %889 = vmatpush1.bf16.msra.mxu0 %v700
      %890 = vmatprep.subr.bf16.mxu0 0
      %891 = vmatpush1.bf16.msra.mxu0 %v701
      %892 = vmatprep.subr.bf16.mxu0 0
      %893 = vmatpush1.bf16.msra.mxu0 %v702
      %894 = vmatprep.subr.bf16.mxu0 0
      %895 = vmatpush1.bf16.msra.mxu0 %v703
      %896 = vmatprep.subr.bf16.mxu0 0
      %897 = vmatpush1.bf16.msra.mxu0 %v704
      %898 = vmatprep.subr.bf16.mxu0 0
      %899 = vmatpush1.bf16.msra.mxu0 %v705
      %900 = vmatprep.mubr.bf16.mxu0 %v411
      %901 = vmatmul.mubr.bf16.gmra.mrb[0].mxu0 %v410
      %v902 = vpop.f32.mrb[0].mxu0
      %v903 = vadd.f32 %v854, %v902
      %v904 = vpop.f32.mrb[0].mxu0
      %v905 = vpop.f32.mrb[0].mxu0
      %v906 = vadd.f32 %v857, %v905
      %v907 = vpop.f32.mrb[0].mxu0
      %908 = vmatprep.mubr.bf16.mxu0 %v418
      %909 = vmatmul.mubr.bf16.gmra.mrb[0].mxu0 %v417
      %v910 = vpop.f32.mrb[0].mxu0
      %v911 = vadd.f32 %v862, %v910
      %v912 = vpop.f32.mrb[0].mxu0
      %v913 = vpop.f32.mrb[0].mxu0
      %v914 = vadd.f32 %v865, %v913
      %v915 = vpop.f32.mrb[0].mxu0
      %916 = vdwg.mxu0
      %917 = vmatprep.subr.bf16.mxu0 0
      %918 = vmatpush1.bf16.msra.mxu0 %v706
      %919 = vmatprep.subr.bf16.mxu0 0
      %920 = vmatpush1.bf16.msra.mxu0 %v707
      %921 = vmatprep.subr.bf16.mxu0 0
      %922 = vmatpush1.bf16.msra.mxu0 %v708
      %923 = vmatprep.subr.bf16.mxu0 0
      %924 = vmatpush1.bf16.msra.mxu0 %v709
      %925 = vmatprep.subr.bf16.mxu0 0
      %926 = vmatpush1.bf16.msra.mxu0 %v710
      %927 = vmatprep.subr.bf16.mxu0 0
      %928 = vmatpush1.bf16.msra.mxu0 %v711
      %929 = vmatprep.subr.bf16.mxu0 0
      %930 = vmatpush1.bf16.msra.mxu0 %v712
      %931 = vmatprep.subr.bf16.mxu0 0
      %932 = vmatpush1.bf16.msra.mxu0 %v713
      %933 = vmatprep.subr.bf16.mxu0 0
      %934 = vmatpush1.bf16.msra.mxu0 0
      %935 = vmatprep.subr.bf16.mxu0 0
      %936 = vmatpush1.bf16.msra.mxu0 0
      %937 = vmatprep.subr.bf16.mxu0 0
      %938 = vmatpush1.bf16.msra.mxu0 0
      %939 = vmatprep.subr.bf16.mxu0 0
      %940 = vmatpush1.bf16.msra.mxu0 0
      %941 = vmatprep.subr.bf16.mxu0 0
      %942 = vmatpush1.bf16.msra.mxu0 0
      %943 = vmatprep.subr.bf16.mxu0 0
      %944 = vmatpush1.bf16.msra.mxu0 0
      %945 = vmatprep.subr.bf16.mxu0 0
      %946 = vmatpush1.bf16.msra.mxu0 0
      %947 = vmatprep.subr.bf16.mxu0 0
      %948 = vmatpush1.bf16.msra.mxu0 0
      %949 = vmatprep.mubr.bf16.mxu0 0
      %950 = vmatmul.mubr.bf16.gmra.mrb[0].mxu0 %v412
      %v951 = vpop.f32.mrb[0].mxu0
      %v952 = vadd.f32 %v903, %v951
      %v953 = vpop.f32.mrb[0].mxu0
      %v954 = vpop.f32.mrb[0].mxu0
      %v955 = vadd.f32 %v906, %v954
      %v956 = vpop.f32.mrb[0].mxu0
      %957 = vmatprep.mubr.bf16.mxu0 0
      %958 = vmatmul.mubr.bf16.gmra.mrb[0].mxu0 %v419
      %v959 = vpop.f32.mrb[0].mxu0
      %v960 = vadd.f32 %v911, %v959
      %v961 = vpop.f32.mrb[0].mxu0
      %v962 = vpop.f32.mrb[0].mxu0
      %v963 = vadd.f32 %v914, %v962
      %v964 = vpop.f32.mrb[0].mxu0
      %965 = vdwg.mxu0
      %v966 = vld [vmem:[%s218] sm:$0xf]
      %v967 = vld [vmem:[%s218 + $0x4] sm:$0xf]
      %v968 = vld [vmem:[%s218 + $0x8] sm:$0xf]
      %v969 = vld [vmem:[%s218 + $0xc] sm:$0xf]
      %v970 = vunpack.c.l.bf16 %v966
      %v971 = vunpack.c.l.bf16 %v967
      %v972 = vunpack.c.l.bf16 %v968
      %v973 = vunpack.c.l.bf16 %v969
      %v974 = vadd.f32 %v952, %v970
      %v975 = vadd.f32 %v955, %v971
      %v976 = vadd.f32 %v960, %v972
      %v977 = vadd.f32 %v963, %v973
      %v978 = vmax.f32 %v974, 0.0
      %v979 = vmax.f32 %v975, 0.0
      %v980 = vmax.f32 %v976, 0.0
      %v981 = vmax.f32 %v977, 0.0
      %982 = vst [vmem:[%s224] sm:$0xff] %v978
      %983 = vst [vmem:[%s224 + $0x8] sm:$0xff] %v979
      %984 = vst [vmem:[%s224 + $0x10] sm:$0xff] %v980
      %985 = vst [vmem:[%s224 + $0x18] sm:$0xff] %v981
      %s986 = smul.u32 4, %s15
      %p987 = scmp.lt.s32.totalorder %s986, 15
      %s988 = scalar_select %p987, %s986, 15
      %s989 = smul.addr %s988, 8
      %s990 = scalar_lea.vmem %s4, %s989
      // Predicated region
      $region37: #{basic_block_forward.3} parent=35 // pred_check
        %p991 = pneg %p127
      $region38: #{basic_block_forward.3} parent=35 // pred_check_branch
        %993 = sbr.rel (%p991) target = $region40
      $region39: #{basic_block_forward.3} parent=35 // pred_region
        %s994 = smul.u32 4, %s15
      $region40: #{basic_block_forward.3} parent=35 // pred_fallthru
        _
    $region36: #{basic_block_forward.3} parent=5 // pred_fallthru
      _
    %p995 = scmp.le.s32.totalorder 2, %s10
    // Predicated region
    $region41: #{basic_block_forward.3} parent=5 // pred_check
      %p996 = pneg %p995
    $region42: #{basic_block_forward.3} parent=5 // pred_check_branch
      %998 = sbr.rel (%p996) target = $region44
    $region43: #{basic_block_forward.3} parent=5 // pred_region
      %s999 = ssub.s32 %s10, 2
      // Predicated region
      $region45: #{basic_block_forward.3} parent=43 // pred_check
        %p1000 = pneg %p133
      $region46: #{basic_block_forward.3} parent=43 // pred_check_branch
        %1002 = sbr.rel (%p1000) target = $region48
      $region47: #{basic_block_forward.3} parent=43 // pred_region
        %s1003 = smul.u32 4, %s16
        %p1004 = scmp.lt.s32.totalorder %s1003, 15
        %s1005 = scalar_select %p1004, %s1003, 15
        %s1006 = smul.addr %s1005, 8
        %s1007 = scalar_lea.vmem %s4, %s1006
      $region48: #{basic_block_forward.3} parent=43 // pred_fallthru
        _
    $region44: #{basic_block_forward.3} parent=5 // pred_fallthru
      _
  $region6: #{basic_block_forward.3} parent=0 // loop_footer
    %s14 = sadd.s32 1, %s10
  $region7: #{basic_block_forward.3} parent=0 // loop_footer_branch
    %9 = sbr.rel target = $region3
  $region8: #{basic_block_forward.3} parent=0 // loop_exit
    _

</llo_original>
